<compile_context>
chip_gen: v7x
topology: tpu7x:2x2x1
jax: 0.10.0
libtpu: 0.0.40
codegen_flags: <defaults>
</compile_context>

<pallas_src>
import jax
import jax.numpy as jnp
from jax.experimental import pallas as pl
from jax.experimental.pallas import tpu as pltpu

# ---------------- model sizes (scaled-down but structurally faithful) ----------------
NUM_NODES = 64          # module: 15000
INPUT_DIM = 128         # module: 768 (BERT pooler dim)
HIDDEN_DIM = 10         # module: 10
HIDDEN_PAD = 128        # padded GCN hidden width (zero-padded, math unchanged)
OUTPUT_DIM = 128        # module: 128
R_DIM = 60              # module: 60
R_PAD = 128             # padded relation width
INPUT_SIZE = OUTPUT_DIM + R_DIM + OUTPUT_DIM   # 316 (module's LSTM input_size)
HIDDEN_SIZE = 128       # module: 128
NUM_TRIPLES = 16        # batch of triples scored per call
NUM_EDGES = 200


# ---------------- fused Pallas kernel: GCN -> gather -> LSTM -> score ----------------
def _saar_kernel(a_ref, x_ref, w1_ref, b1_ref, w2_ref, b2_ref,
                 hid_ref, tid_ref, r_ref, wh_ref, wr_ref, wt_ref, bias_ref,
                 o_ref):
    f32 = jnp.float32
    bf16 = jnp.bfloat16
    N = a_ref.shape[0]
    T = hid_ref.shape[0]
    H = HIDDEN_SIZE

    # ---- GCN layer 1: relu( A_hat @ (X @ W1) + b1 )  (bf16 MXU, f32 accumulation) ----
    xw1 = jnp.dot(x_ref[...], w1_ref[...], preferred_element_type=f32)            # (N, 128)
    h1 = jnp.dot(a_ref[...], xw1.astype(bf16), preferred_element_type=f32) + b1_ref[...]
    h1 = jnp.maximum(h1, 0.0).astype(bf16)                                         # (N, 128)

    # ---- GCN layer 2, re-associated: (A_hat @ H1) @ W2 + b2 ----
    ah1 = jnp.dot(a_ref[...], h1, preferred_element_type=f32).astype(bf16)         # (N, 128)
    emb = (jnp.dot(ah1, w2_ref[...], preferred_element_type=f32)
           + b2_ref[...]).astype(bf16)                                             # (N, 128)

    # ---- gather head/tail rows via one-hot matmul (MXU-friendly, no dynamic gather) ----
    col = jax.lax.broadcasted_iota(jnp.int32, (T, N), 1)
    oh_h = (hid_ref[...] == col).astype(bf16)                                      # (T, N)
    oh_t = (tid_ref[...] == col).astype(bf16)                                      # (T, N)
    h_vec = jnp.dot(oh_h, emb, preferred_element_type=f32).astype(bf16)            # (T, 128)
    t_vec = jnp.dot(oh_t, emb, preferred_element_type=f32).astype(bf16)            # (T, 128)

    # ---- single-step LSTM with zero (h0, c0); concat replaced by split matmuls ----
    # gates = [h, r, t] @ W_ih^T + (b_ih + b_hh), gate order [i, f, g, o]
    gates = (jnp.dot(h_vec, wh_ref[...], preferred_element_type=f32)
             + jnp.dot(r_ref[...], wr_ref[...], preferred_element_type=f32)
             + jnp.dot(t_vec, wt_ref[...], preferred_element_type=f32)
             + bias_ref[...])                                                      # (T, 512)
    i_g = jax.nn.sigmoid(gates[:, 0 * H:1 * H])
    # forget gate is dead with c0 = 0 (f * c0 = 0) -> not computed
    g_g = jnp.tanh(gates[:, 2 * H:3 * H])
    o_g = jax.nn.sigmoid(gates[:, 3 * H:4 * H])
    h_out = o_g * jnp.tanh(i_g * g_g)                                              # (T, 128)

    # score = sigmoid( sum(lstm output) ); broadcast across 128 lanes so the store
    # is unmasked full-lane; wrapper reads lane 0.
    s = jax.nn.sigmoid(jnp.sum(h_out, axis=-1, keepdims=True))                     # (T, 1)
    o_ref[...] = jnp.broadcast_to(s, (T, H))


@jax.jit
def saar_forward(x, a_hat, params, h_ids, t_ids, r_pad):
    w1, b1, w2, b2, w_h, w_r, w_t, bias = params
    T = h_ids.shape[0]
    vmem = lambda: pl.BlockSpec(memory_space=pltpu.MemorySpace.VMEM)
    out = pl.pallas_call(
        _saar_kernel,
        out_shape=jax.ShapeDtypeStruct((T, HIDDEN_SIZE), jnp.float32),
        in_specs=[vmem() for _ in range(13)],
        out_specs=vmem(),
    )(a_hat, x, w1, b1, w2, b2, h_ids, t_ids, r_pad, w_h, w_r, w_t, bias)
    return out[:, 0]                                                               # (T,)


# ---------------- deterministic setup ----------------
def build_inputs_and_params():
    key = jax.random.PRNGKey(0)
    ks = jax.random.split(key, 12)
    bf16 = lambda t: t.astype(jnp.bfloat16)

    # synthetic node features (stand-in for BERT pooler outputs of neighbor lists)
    x = jax.random.normal(ks[0], (NUM_NODES, INPUT_DIM), jnp.float32) * 0.1

    # random edge_index -> dense symmetric-normalized adjacency with self loops
    src = jax.random.randint(ks[1], (NUM_EDGES,), 0, NUM_NODES)
    dst = jax.random.randint(ks[2], (NUM_EDGES,), 0, NUM_NODES)
    a = jnp.zeros((NUM_NODES, NUM_NODES), jnp.float32).at[dst, src].set(1.0)
    a = jnp.minimum(a + jnp.eye(NUM_NODES, dtype=jnp.float32), 1.0)
    deg = a.sum(axis=1)
    d_inv_sqrt = 1.0 / jnp.sqrt(jnp.maximum(deg, 1.0))
    a_hat = d_inv_sqrt[:, None] * a * d_inv_sqrt[None, :]

    # GCNConv params (stored (in, out)), zero-padded: hidden 10 -> 128
    w1 = jax.random.normal(ks[3], (INPUT_DIM, HIDDEN_DIM), jnp.float32) * 0.05
    b1 = jax.random.normal(ks[4], (1, HIDDEN_DIM), jnp.float32) * 0.01
    w2 = jax.random.normal(ks[5], (HIDDEN_DIM, OUTPUT_DIM), jnp.float32) * 0.05
    b2 = jax.random.normal(ks[6], (1, OUTPUT_DIM), jnp.float32) * 0.01
    w1_p = jnp.zeros((INPUT_DIM, HIDDEN_PAD), jnp.float32).at[:, :HIDDEN_DIM].set(w1)
    b1_p = jnp.zeros((1, HIDDEN_PAD), jnp.float32).at[:, :HIDDEN_DIM].set(b1)
    w2_p = jnp.zeros((HIDDEN_PAD, OUTPUT_DIM), jnp.float32).at[:HIDDEN_DIM, :].set(w2)

    # LSTM params: weight_ih_l0 (4H, 316) stored transposed (316, 4H), split into the
    # [h | r | t] row-blocks; r block zero-padded 60 -> 128 rows (zero rows at padded
    # r positions, so math is unchanged).  Biases summed (h0 = 0 path).
    w_ih_t = jax.random.normal(ks[7], (INPUT_SIZE, 4 * HIDDEN_SIZE), jnp.float32) * 0.05
    b_ih = jax.random.normal(ks[8], (1, 4 * HIDDEN_SIZE), jnp.float32) * 0.01
    b_hh = jax.random.normal(ks[9], (1, 4 * HIDDEN_SIZE), jnp.float32) * 0.01
    bias = b_ih + b_hh
    w_h = w_ih_t[:OUTPUT_DIM, :]                                                    # (128, 512)
    w_r = jnp.zeros((R_PAD, 4 * HIDDEN_SIZE), jnp.float32).at[:R_DIM, :].set(
        w_ih_t[OUTPUT_DIM:OUTPUT_DIM + R_DIM, :])                                   # (128, 512)
    w_t = w_ih_t[OUTPUT_DIM + R_DIM:, :]                                            # (128, 512)

    # triples and per-triple relation vectors (r zero-padded 60 -> 128)
    h_ids = jax.random.randint(ks[10], (NUM_TRIPLES, 1), 0, NUM_NODES, dtype=jnp.int32)
    t_ids = jax.random.randint(ks[11], (NUM_TRIPLES, 1), 0, NUM_NODES, dtype=jnp.int32)
    r = jax.random.uniform(jax.random.PRNGKey(1), (NUM_TRIPLES, R_DIM), jnp.float32)
    r_pad = jnp.zeros((NUM_TRIPLES, R_PAD), jnp.float32).at[:, :R_DIM].set(r)

    # bf16 casts for every matmul operand (f32 accumulation happens inside the kernel);
    # biases stay f32.
    params = (bf16(w1_p), b1_p, bf16(w2_p), b2, bf16(w_h), bf16(w_r), bf16(w_t), bias)
    return bf16(x), bf16(a_hat), params, h_ids, t_ids, bf16(r_pad)


if __name__ == "__main__":
    x, a_hat, params, h_ids, t_ids, r_pad = build_inputs_and_params()
    scores = saar_forward(x, a_hat, params, h_ids, t_ids, r_pad)
    scores = jax.block_until_ready(scores)
    assert scores.shape == (NUM_TRIPLES,)
    assert bool(jnp.all(jnp.isfinite(scores)))
    assert bool(jnp.all((scores >= 0.0) & (scores <= 1.0)))
    print("KERNEL_OK")
</pallas_src>

<mosaic_0001>
module attributes {stable_mosaic.version = 11 : i64} {
  func.func @_saar_kernel(%arg0: memref<64x64xbf16, #tpu.memory_space<vmem>>, %arg1: memref<64x128xbf16, #tpu.memory_space<vmem>>, %arg2: memref<128x128xbf16, #tpu.memory_space<vmem>>, %arg3: memref<1x128xf32, #tpu.memory_space<vmem>>, %arg4: memref<128x128xbf16, #tpu.memory_space<vmem>>, %arg5: memref<1x128xf32, #tpu.memory_space<vmem>>, %arg6: memref<16x1xi32, #tpu.memory_space<vmem>>, %arg7: memref<16x1xi32, #tpu.memory_space<vmem>>, %arg8: memref<16x128xbf16, #tpu.memory_space<vmem>>, %arg9: memref<128x512xbf16, #tpu.memory_space<vmem>>, %arg10: memref<128x512xbf16, #tpu.memory_space<vmem>>, %arg11: memref<128x512xbf16, #tpu.memory_space<vmem>>, %arg12: memref<1x512xf32, #tpu.memory_space<vmem>>, %arg13: memref<16x128xf32, #tpu.memory_space<vmem>>) attributes {dimension_semantics = [], scalar_prefetch = 0 : i64, scratch_operands = 0 : i64, tpu.core_type = #tpu.core_type<tc>} {
    %c0 = arith.constant 0 : index
    %c0_0 = arith.constant 0 : index
    %0 = vector.load %arg1[%c0, %c0_0] : memref<64x128xbf16, #tpu.memory_space<vmem>>, vector<64x128xbf16>
    %c0_1 = arith.constant 0 : index
    %c0_2 = arith.constant 0 : index
    %1 = vector.load %arg2[%c0_1, %c0_2] : memref<128x128xbf16, #tpu.memory_space<vmem>>, vector<128x128xbf16>
    %cst = arith.constant dense<0.000000e+00> : vector<64x128xf32>
    %2 = tpu.matmul %0, %1, %cst {dimension_numbers = #tpu.dot_dimension_numbers<[1], [0], [0], [1], [0, 0, 1, 1], [], []>} : vector<64x128xbf16>, vector<128x128xbf16>, vector<64x128xf32> -> vector<64x128xf32>
    %c0_3 = arith.constant 0 : index
    %c0_4 = arith.constant 0 : index
    %3 = vector.load %arg0[%c0_3, %c0_4] : memref<64x64xbf16, #tpu.memory_space<vmem>>, vector<64x64xbf16>
    %4 = arith.truncf %2 : vector<64x128xf32> to vector<64x128xbf16>
    %cst_5 = arith.constant dense<0.000000e+00> : vector<64x128xf32>
    %5 = tpu.matmul %3, %4, %cst_5 {dimension_numbers = #tpu.dot_dimension_numbers<[1], [0], [0], [1], [0, 0, 1, 1], [], []>} : vector<64x64xbf16>, vector<64x128xbf16>, vector<64x128xf32> -> vector<64x128xf32>
    %c0_6 = arith.constant 0 : index
    %c0_7 = arith.constant 0 : index
    %6 = vector.load %arg3[%c0_6, %c0_7] : memref<1x128xf32, #tpu.memory_space<vmem>>, vector<1x128xf32>
    %7 = vector.broadcast %6 : vector<1x128xf32> to vector<64x128xf32>
    %8 = arith.addf %5, %7 : vector<64x128xf32>
    %cst_8 = arith.constant 0.000000e+00 : f32
    %9 = vector.broadcast %cst_8 : f32 to vector<64x128xf32>
    %10 = arith.maximumf %8, %9 : vector<64x128xf32>
    %11 = arith.truncf %10 : vector<64x128xf32> to vector<64x128xbf16>
    %c0_9 = arith.constant 0 : index
    %c0_10 = arith.constant 0 : index
    %12 = vector.load %arg0[%c0_9, %c0_10] : memref<64x64xbf16, #tpu.memory_space<vmem>>, vector<64x64xbf16>
    %cst_11 = arith.constant dense<0.000000e+00> : vector<64x128xf32>
    %13 = tpu.matmul %12, %11, %cst_11 {dimension_numbers = #tpu.dot_dimension_numbers<[1], [0], [0], [1], [0, 0, 1, 1], [], []>} : vector<64x64xbf16>, vector<64x128xbf16>, vector<64x128xf32> -> vector<64x128xf32>
    %14 = arith.truncf %13 : vector<64x128xf32> to vector<64x128xbf16>
    %c0_12 = arith.constant 0 : index
    %c0_13 = arith.constant 0 : index
    %15 = vector.load %arg4[%c0_12, %c0_13] : memref<128x128xbf16, #tpu.memory_space<vmem>>, vector<128x128xbf16>
    %cst_14 = arith.constant dense<0.000000e+00> : vector<64x128xf32>
    %16 = tpu.matmul %14, %15, %cst_14 {dimension_numbers = #tpu.dot_dimension_numbers<[1], [0], [0], [1], [0, 0, 1, 1], [], []>} : vector<64x128xbf16>, vector<128x128xbf16>, vector<64x128xf32> -> vector<64x128xf32>
    %c0_15 = arith.constant 0 : index
    %c0_16 = arith.constant 0 : index
    %17 = vector.load %arg5[%c0_15, %c0_16] : memref<1x128xf32, #tpu.memory_space<vmem>>, vector<1x128xf32>
    %18 = vector.broadcast %17 : vector<1x128xf32> to vector<64x128xf32>
    %19 = arith.addf %16, %18 : vector<64x128xf32>
    %20 = arith.truncf %19 : vector<64x128xf32> to vector<64x128xbf16>
    %21 = tpu.iota {dimensions = array<i32: 1>} : vector<16x64xi32>
    %c0_17 = arith.constant 0 : index
    %c0_18 = arith.constant 0 : index
    %22 = vector.load %arg6[%c0_17, %c0_18] : memref<16x1xi32, #tpu.memory_space<vmem>>, vector<16x1xi32>
    %23 = vector.broadcast %22 : vector<16x1xi32> to vector<16x64xi32>
    %24 = arith.cmpi eq, %23, %21 : vector<16x64xi32>
    %25 = arith.extui %24 : vector<16x64xi1> to vector<16x64xi32>
    %26 = arith.sitofp %25 : vector<16x64xi32> to vector<16x64xf32>
    %27 = arith.truncf %26 : vector<16x64xf32> to vector<16x64xbf16>
    %c0_19 = arith.constant 0 : index
    %c0_20 = arith.constant 0 : index
    %28 = vector.load %arg7[%c0_19, %c0_20] : memref<16x1xi32, #tpu.memory_space<vmem>>, vector<16x1xi32>
    %29 = vector.broadcast %28 : vector<16x1xi32> to vector<16x64xi32>
    %30 = arith.cmpi eq, %29, %21 : vector<16x64xi32>
    %31 = arith.extui %30 : vector<16x64xi1> to vector<16x64xi32>
    %32 = arith.sitofp %31 : vector<16x64xi32> to vector<16x64xf32>
    %33 = arith.truncf %32 : vector<16x64xf32> to vector<16x64xbf16>
    %cst_21 = arith.constant dense<0.000000e+00> : vector<16x128xf32>
    %34 = tpu.matmul %27, %20, %cst_21 {dimension_numbers = #tpu.dot_dimension_numbers<[1], [0], [0], [1], [0, 0, 1, 1], [], []>} : vector<16x64xbf16>, vector<64x128xbf16>, vector<16x128xf32> -> vector<16x128xf32>
    %35 = arith.truncf %34 : vector<16x128xf32> to vector<16x128xbf16>
    %cst_22 = arith.constant dense<0.000000e+00> : vector<16x128xf32>
    %36 = tpu.matmul %33, %20, %cst_22 {dimension_numbers = #tpu.dot_dimension_numbers<[1], [0], [0], [1], [0, 0, 1, 1], [], []>} : vector<16x64xbf16>, vector<64x128xbf16>, vector<16x128xf32> -> vector<16x128xf32>
    %37 = arith.truncf %36 : vector<16x128xf32> to vector<16x128xbf16>
    %c0_23 = arith.constant 0 : index
    %c0_24 = arith.constant 0 : index
    %38 = vector.load %arg9[%c0_23, %c0_24] : memref<128x512xbf16, #tpu.memory_space<vmem>>, vector<128x512xbf16>
    %cst_25 = arith.constant dense<0.000000e+00> : vector<16x512xf32>
    %39 = tpu.matmul %35, %38, %cst_25 {dimension_numbers = #tpu.dot_dimension_numbers<[1], [0], [0], [1], [0, 0, 1, 1], [], []>} : vector<16x128xbf16>, vector<128x512xbf16>, vector<16x512xf32> -> vector<16x512xf32>
    %c0_26 = arith.constant 0 : index
    %c0_27 = arith.constant 0 : index
    %40 = vector.load %arg8[%c0_26, %c0_27] : memref<16x128xbf16, #tpu.memory_space<vmem>>, vector<16x128xbf16>
    %c0_28 = arith.constant 0 : index
    %c0_29 = arith.constant 0 : index
    %41 = vector.load %arg10[%c0_28, %c0_29] : memref<128x512xbf16, #tpu.memory_space<vmem>>, vector<128x512xbf16>
    %cst_30 = arith.constant dense<0.000000e+00> : vector<16x512xf32>
    %42 = tpu.matmul %40, %41, %cst_30 {dimension_numbers = #tpu.dot_dimension_numbers<[1], [0], [0], [1], [0, 0, 1, 1], [], []>} : vector<16x128xbf16>, vector<128x512xbf16>, vector<16x512xf32> -> vector<16x512xf32>
    %43 = arith.addf %39, %42 : vector<16x512xf32>
    %c0_31 = arith.constant 0 : index
    %c0_32 = arith.constant 0 : index
    %44 = vector.load %arg11[%c0_31, %c0_32] : memref<128x512xbf16, #tpu.memory_space<vmem>>, vector<128x512xbf16>
    %cst_33 = arith.constant dense<0.000000e+00> : vector<16x512xf32>
    %45 = tpu.matmul %37, %44, %cst_33 {dimension_numbers = #tpu.dot_dimension_numbers<[1], [0], [0], [1], [0, 0, 1, 1], [], []>} : vector<16x128xbf16>, vector<128x512xbf16>, vector<16x512xf32> -> vector<16x512xf32>
    %46 = arith.addf %43, %45 : vector<16x512xf32>
    %c0_34 = arith.constant 0 : index
    %c0_35 = arith.constant 0 : index
    %47 = vector.load %arg12[%c0_34, %c0_35] : memref<1x512xf32, #tpu.memory_space<vmem>>, vector<1x512xf32>
    %48 = vector.broadcast %47 : vector<1x512xf32> to vector<16x512xf32>
    %49 = arith.addf %46, %48 : vector<16x512xf32>
    %50 = vector.extract_strided_slice %49 {offsets = [0, 0], sizes = [16, 128], strides = [1, 1]} : vector<16x512xf32> to vector<16x128xf32>
    %51 = arith.negf %50 : vector<16x128xf32>
    %52 = math.exp %51 : vector<16x128xf32>
    %cst_36 = arith.constant 1.000000e+00 : f32
    %53 = vector.broadcast %cst_36 : f32 to vector<16x128xf32>
    %54 = arith.addf %53, %52 : vector<16x128xf32>
    %55 = arith.divf %53, %54 : vector<16x128xf32>
    %56 = vector.extract_strided_slice %49 {offsets = [0, 256], sizes = [16, 128], strides = [1, 1]} : vector<16x512xf32> to vector<16x128xf32>
    %57 = math.tanh %56 : vector<16x128xf32>
    %58 = vector.extract_strided_slice %49 {offsets = [0, 384], sizes = [16, 128], strides = [1, 1]} : vector<16x512xf32> to vector<16x128xf32>
    %59 = arith.negf %58 : vector<16x128xf32>
    %60 = math.exp %59 : vector<16x128xf32>
    %cst_37 = arith.constant 1.000000e+00 : f32
    %61 = vector.broadcast %cst_37 : f32 to vector<16x128xf32>
    %62 = arith.addf %61, %60 : vector<16x128xf32>
    %63 = arith.divf %61, %62 : vector<16x128xf32>
    %64 = arith.mulf %55, %57 : vector<16x128xf32>
    %65 = math.tanh %64 : vector<16x128xf32>
    %66 = arith.mulf %63, %65 : vector<16x128xf32>
    %cst_38 = arith.constant dense<0.000000e+00> : vector<16xf32>
    %67 = vector.multi_reduction <add>, %66, %cst_38 [1] : vector<16x128xf32> to vector<16xf32>
    %68 = vector.shape_cast %67 : vector<16xf32> to vector<16x1xf32>
    %69 = arith.negf %68 : vector<16x1xf32>
    %70 = math.exp %69 : vector<16x1xf32>
    %cst_39 = arith.constant 1.000000e+00 : f32
    %71 = vector.broadcast %cst_39 : f32 to vector<16x1xf32>
    %72 = arith.addf %71, %70 : vector<16x1xf32>
    %73 = arith.divf %71, %72 : vector<16x1xf32>
    %74 = vector.shape_cast %73 : vector<16x1xf32> to vector<16x1xf32>
    %75 = vector.broadcast %74 : vector<16x1xf32> to vector<16x128xf32>
    %c0_40 = arith.constant 0 : index
    %c0_41 = arith.constant 0 : index
    %76 = vector.load %arg13[%c0_40, %c0_41] : memref<16x128xf32, #tpu.memory_space<vmem>>, vector<16x128xf32>
    tpu.vector_store %arg13[%c0_40, %c0_41], %75 {strides = array<i32>} : memref<16x128xf32, #tpu.memory_space<vmem>>, vector<16x128xf32>,
    return
  }
}

</mosaic_0001>

<llo_original>
// kernel: saar_forward.1
$region0: #{saar_forward.1}
  #allocation0 [shape = 'u32[]', space=smem, size = 0x4, offset = 0x4, fixed_abs, tag = 'smem constant byte address 0x4 - core index']
  #allocation1 [shape = 'u32[144,128]{1,0:T(1,128)}', space=vmem, size = 0x12000, scoped, tag = 'internal scratch']
  %s0 = inlined_call_operand.vmem [shape: bf16[64,64], index: 0, kind: input, shape index: {}]
  %s1 = inlined_call_operand.hbm [shape: bf16[64,128], index: 1, kind: input, shape index: {}]
  %s2 = inlined_call_operand.hbm [shape: bf16[128,128], index: 2, kind: input, shape index: {}]
  %s3 = inlined_call_operand.hbm [shape: f32[1,128], index: 3, kind: input, shape index: {}]
  %s4 = inlined_call_operand.hbm [shape: bf16[128,128], index: 4, kind: input, shape index: {}]
  %s5 = inlined_call_operand.vmem [shape: f32[1,128], index: 5, kind: input, shape index: {}]
  %s6 = inlined_call_operand.vmem [shape: s32[16,1], index: 6, kind: input, shape index: {}]
  %s7 = inlined_call_operand.vmem [shape: s32[16,1], index: 7, kind: input, shape index: {}]
  %s8 = inlined_call_operand.vmem [shape: bf16[16,128], index: 8, kind: input, shape index: {}]
  %s9 = inlined_call_operand.hbm [shape: bf16[128,512], index: 9, kind: input, shape index: {}]
  %s10 = inlined_call_operand.hbm [shape: bf16[128,512], index: 10, kind: input, shape index: {}]
  %s11 = inlined_call_operand.hbm [shape: bf16[128,512], index: 11, kind: input, shape index: {}]
  %s12 = inlined_call_operand.vmem [shape: f32[1,512], index: 12, kind: input, shape index: {}]
  %s13 = inlined_call_operand.vmem [shape: f32[16,128], index: 13, kind: output, shape index: {}]
  %s14 = sld [smem:[#allocation0]]
  $region90: #{saar_forward.1} parent=0
    _
  %s16 = ssub.s32 1, %s14
  %s17 = scalar_select 0, %s16, %s14
  $region1: #{saar_forward.1} parent=0
    #allocation2 [shape = 'u8[16384]{0}', space=vmem, size = 0x4000, scoped, tag = 'input window, operand 1, single buffered']
    #allocation3 [shape = 's32[1]{0}', space=sflag, size = 0x4, scoped, tag = 'scoped memory for saar_forward.1']
    #allocation4 [shape = 'u8[32768]{0}', space=vmem, size = 0x8000, scoped, tag = 'input window, operand 2, single buffered']
    #allocation5 [shape = 's32[1]{0}', space=sflag, size = 0x4, scoped, tag = 'scoped memory for saar_forward.1']
    #allocation6 [shape = 'u8[512]{0}', space=vmem, size = 0x400, scoped, tag = 'input window, operand 3, single buffered']
    #allocation7 [shape = 'u8[32768]{0}', space=vmem, size = 0x8000, scoped, tag = 'input window, operand 4, single buffered']
    #allocation8 [shape = 's32[1]{0}', space=sflag, size = 0x4, scoped, tag = 'scoped memory for saar_forward.1']
    #allocation9 [shape = 'u8[131072]{0}', space=vmem, size = 0x20000, scoped, tag = 'input window, operand 9, single buffered']
    #allocation10 [shape = 'u8[131072]{0}', space=vmem, size = 0x20000, scoped, tag = 'input window, operand 10, single buffered']
    #allocation11 [shape = 's32[1]{0}', space=sflag, size = 0x4, scoped, tag = 'scoped memory for saar_forward.1']
    #allocation12 [shape = 'u8[131072]{0}', space=vmem, size = 0x20000, scoped, tag = 'input window, operand 11, single buffered']
    %18 = vsyncpa [#allocation3], 0
    %19 = vsyncpa [#allocation5], 0
    %20 = vsyncpa [#allocation8], 0
    %21 = vsyncpa [#allocation11], 0
    // Predicated region
    $region2: #{saar_forward.1} parent=1 // pred_check
      _
    $region3: #{saar_forward.1} parent=1 // pred_check_branch
      %23 = sbr.rel (0) target = $region5
    $region4: #{saar_forward.1} parent=1 // pred_region
      _
    $region5: #{saar_forward.1} parent=1 // pred_fallthru
      _
    // Predicated region
    $region6: #{saar_forward.1} parent=1 // pred_check
      _
    $region7: #{saar_forward.1} parent=1 // pred_check_branch
      %25 = sbr.rel (0) target = $region9
    $region8: #{saar_forward.1} parent=1 // pred_region
      %s27 = ssub.s32 512, 512
      %28 = vsyncadd [#allocation3], %s27
      %s29 = sshll.u32 [#allocation2], 4
      %s30 = int_to_ptr.vmem [resolvable:$true] %s29
      %35 = dma.hbm_to_vmem [thread:$0]  %s1, 512, %s30, [#allocation3], 64, 64, 4
    $region9: #{saar_forward.1} parent=1 // pred_fallthru
      _
    // Predicated region
    $region10: #{saar_forward.1} parent=1 // pred_check
      _
    $region11: #{saar_forward.1} parent=1 // pred_check_branch
      %37 = sbr.rel (0) target = $region13
    $region12: #{saar_forward.1} parent=1 // pred_region
      %s39 = ssub.s32 1024, 1024
      %40 = vsyncadd [#allocation5], %s39
      %s41 = sshll.u32 [#allocation4], 4
      %s42 = int_to_ptr.vmem [resolvable:$true] %s41
      %47 = dma.hbm_to_vmem [thread:$0]  %s2, 1024, %s42, [#allocation5], 64, 64, 4
    $region13: #{saar_forward.1} parent=1 // pred_fallthru
      _
    // Predicated region
    $region14: #{saar_forward.1} parent=1 // pred_check
      _
    $region15: #{saar_forward.1} parent=1 // pred_check_branch
      %49 = sbr.rel (0) target = $region17
    $region16: #{saar_forward.1} parent=1 // pred_region
      %s51 = ssub.s32 16, 16
      %52 = vsyncadd [#allocation5], %s51
      %s54 = sshll.u32 [#allocation6], 4
      %s55 = int_to_ptr.vmem [resolvable:$true] %s54
      %57 = dma.hbm_to_vmem [thread:$0]  %s3, 16, %s55, [#allocation5]
    $region17: #{saar_forward.1} parent=1 // pred_fallthru
      _
    // Predicated region
    $region18: #{saar_forward.1} parent=1 // pred_check
      _
    $region19: #{saar_forward.1} parent=1 // pred_check_branch
      %59 = sbr.rel (0) target = $region21
    $region20: #{saar_forward.1} parent=1 // pred_region
      %s61 = ssub.s32 1024, 1024
      %62 = vsyncadd [#allocation8], %s61
      %s63 = sshll.u32 [#allocation7], 4
      %s64 = int_to_ptr.vmem [resolvable:$true] %s63
      %69 = dma.hbm_to_vmem [thread:$0]  %s4, 1024, %s64, [#allocation8], 64, 64, 4
    $region21: #{saar_forward.1} parent=1 // pred_fallthru
      _
    // Predicated region
    $region22: #{saar_forward.1} parent=1 // pred_check
      _
    $region23: #{saar_forward.1} parent=1 // pred_check_branch
      %71 = sbr.rel (0) target = $region25
    $region24: #{saar_forward.1} parent=1 // pred_region
      _
    $region25: #{saar_forward.1} parent=1 // pred_fallthru
      _
    // Predicated region
    $region26: #{saar_forward.1} parent=1 // pred_check
      _
    $region27: #{saar_forward.1} parent=1 // pred_check_branch
      %73 = sbr.rel (0) target = $region29
    $region28: #{saar_forward.1} parent=1 // pred_region
      _
    $region29: #{saar_forward.1} parent=1 // pred_fallthru
      _
    // Predicated region
    $region30: #{saar_forward.1} parent=1 // pred_check
      _
    $region31: #{saar_forward.1} parent=1 // pred_check_branch
      %75 = sbr.rel (0) target = $region33
    $region32: #{saar_forward.1} parent=1 // pred_region
      _
    $region33: #{saar_forward.1} parent=1 // pred_fallthru
      _
    // Predicated region
    $region34: #{saar_forward.1} parent=1 // pred_check
      _
    $region35: #{saar_forward.1} parent=1 // pred_check_branch
      %77 = sbr.rel (0) target = $region37
    $region36: #{saar_forward.1} parent=1 // pred_region
      _
    $region37: #{saar_forward.1} parent=1 // pred_fallthru
      _
    // Predicated region
    $region38: #{saar_forward.1} parent=1 // pred_check
      _
    $region39: #{saar_forward.1} parent=1 // pred_check_branch
      %79 = sbr.rel (0) target = $region41
    $region40: #{saar_forward.1} parent=1 // pred_region
      %s81 = ssub.s32 4096, 4096
      %82 = vsyncadd [#allocation8], %s81
      %s83 = sshll.u32 [#allocation9], 4
      %s84 = int_to_ptr.vmem [resolvable:$true] %s83
      %89 = dma.hbm_to_vmem [thread:$0]  %s9, 4096, %s84, [#allocation8], 256, 256, 16
    $region41: #{saar_forward.1} parent=1 // pred_fallthru
      _
    // Predicated region
    $region42: #{saar_forward.1} parent=1 // pred_check
      _
    $region43: #{saar_forward.1} parent=1 // pred_check_branch
      %91 = sbr.rel (0) target = $region45
    $region44: #{saar_forward.1} parent=1 // pred_region
      %s93 = ssub.s32 4096, 4096
      %94 = vsyncadd [#allocation11], %s93
      %s95 = sshll.u32 [#allocation10], 4
      %s96 = int_to_ptr.vmem [resolvable:$true] %s95
      %101 = dma.hbm_to_vmem [thread:$0]  %s10, 4096, %s96, [#allocation11], 256, 256, 16
    $region45: #{saar_forward.1} parent=1 // pred_fallthru
      _
    // Predicated region
    $region46: #{saar_forward.1} parent=1 // pred_check
      _
    $region47: #{saar_forward.1} parent=1 // pred_check_branch
      %103 = sbr.rel (0) target = $region49
    $region48: #{saar_forward.1} parent=1 // pred_region
      %s105 = ssub.s32 4096, 4096
      %106 = vsyncadd [#allocation11], %s105
      %s107 = sshll.u32 [#allocation12], 4
      %s108 = int_to_ptr.vmem [resolvable:$true] %s107
      %113 = dma.hbm_to_vmem [thread:$0]  %s11, 4096, %s108, [#allocation11], 256, 256, 16
    $region49: #{saar_forward.1} parent=1 // pred_fallthru
      _
    // Predicated region
    $region50: #{saar_forward.1} parent=1 // pred_check
      _
    $region51: #{saar_forward.1} parent=1 // pred_check_branch
      %115 = sbr.rel (0) target = $region53
    $region52: #{saar_forward.1} parent=1 // pred_region
      _
    $region53: #{saar_forward.1} parent=1 // pred_fallthru
      _
    // Predicated region
    $region54: #{saar_forward.1} parent=1 // pred_check
      _
    $region55: #{saar_forward.1} parent=1 // pred_check_branch
      %117 = sbr.rel (0) target = $region57
    $region56: #{saar_forward.1} parent=1 // pred_region
      %118 = dma.done [#allocation3], 512
    $region57: #{saar_forward.1} parent=1 // pred_fallthru
      _
    // Predicated region
    $region58: #{saar_forward.1} parent=1 // pred_check
      _
    $region59: #{saar_forward.1} parent=1 // pred_check_branch
      %120 = sbr.rel (0) target = $region61
    $region60: #{saar_forward.1} parent=1 // pred_region
      %121 = dma.done [#allocation5], 1024
    $region61: #{saar_forward.1} parent=1 // pred_fallthru
      _
    // Predicated region
    $region62: #{saar_forward.1} parent=1 // pred_check
      _
    $region63: #{saar_forward.1} parent=1 // pred_check_branch
      %123 = sbr.rel (0) target = $region65
    $region64: #{saar_forward.1} parent=1 // pred_region
      %124 = dma.done [#allocation5], 16
    $region65: #{saar_forward.1} parent=1 // pred_fallthru
      _
    // Predicated region
    $region66: #{saar_forward.1} parent=1 // pred_check
      _
    $region67: #{saar_forward.1} parent=1 // pred_check_branch
      %126 = sbr.rel (0) target = $region69
    $region68: #{saar_forward.1} parent=1 // pred_region
      %127 = dma.done [#allocation8], 1024
    $region69: #{saar_forward.1} parent=1 // pred_fallthru
      _
    // Predicated region
    $region70: #{saar_forward.1} parent=1 // pred_check
      _
    $region71: #{saar_forward.1} parent=1 // pred_check_branch
      %129 = sbr.rel (0) target = $region73
    $region72: #{saar_forward.1} parent=1 // pred_region
      %130 = dma.done [#allocation8], 4096
    $region73: #{saar_forward.1} parent=1 // pred_fallthru
      _
    // Predicated region
    $region74: #{saar_forward.1} parent=1 // pred_check
      _
    $region75: #{saar_forward.1} parent=1 // pred_check_branch
      %132 = sbr.rel (0) target = $region77
    $region76: #{saar_forward.1} parent=1 // pred_region
      %133 = dma.done [#allocation11], 4096
    $region77: #{saar_forward.1} parent=1 // pred_fallthru
      _
    // Predicated region
    $region78: #{saar_forward.1} parent=1 // pred_check
      _
    $region79: #{saar_forward.1} parent=1 // pred_check_branch
      %135 = sbr.rel (0) target = $region81
    $region80: #{saar_forward.1} parent=1 // pred_region
      %136 = dma.done [#allocation11], 4096
    $region81: #{saar_forward.1} parent=1 // pred_fallthru
      _
    %v138 = vld [vmem:[#allocation2] sm:$0xf]
    %v139 = vld [vmem:[#allocation2 + $0x4] sm:$0xf]
    %v140 = vld [vmem:[#allocation2 + $0x8] sm:$0xf]
    %v141 = vld [vmem:[#allocation2 + $0xc] sm:$0xf]
    %v142 = vld [vmem:[#allocation2 + $0x10] sm:$0xf]
    %v143 = vld [vmem:[#allocation2 + $0x14] sm:$0xf]
    %v144 = vld [vmem:[#allocation2 + $0x18] sm:$0xf]
    %v145 = vld [vmem:[#allocation2 + $0x1c] sm:$0xf]
    %v146 = vld [vmem:[#allocation4] sm:$0xf]
    %v147 = vld [vmem:[#allocation4 + $0x4] sm:$0xf]
    %v148 = vld [vmem:[#allocation4 + $0x8] sm:$0xf]
    %v149 = vld [vmem:[#allocation4 + $0xc] sm:$0xf]
    %v150 = vld [vmem:[#allocation4 + $0x10] sm:$0xf]
    %v151 = vld [vmem:[#allocation4 + $0x14] sm:$0xf]
    %v152 = vld [vmem:[#allocation4 + $0x18] sm:$0xf]
    %v153 = vld [vmem:[#allocation4 + $0x1c] sm:$0xf]
    %v154 = vld [vmem:[#allocation4 + $0x20] sm:$0xf]
    %v155 = vld [vmem:[#allocation4 + $0x24] sm:$0xf]
    %v156 = vld [vmem:[#allocation4 + $0x28] sm:$0xf]
    %v157 = vld [vmem:[#allocation4 + $0x2c] sm:$0xf]
    %v158 = vld [vmem:[#allocation4 + $0x30] sm:$0xf]
    %v159 = vld [vmem:[#allocation4 + $0x34] sm:$0xf]
    %v160 = vld [vmem:[#allocation4 + $0x38] sm:$0xf]
    %v161 = vld [vmem:[#allocation4 + $0x3c] sm:$0xf]
    %v170 = vunpack.c.l.b16 %v138
    %v171 = vunpack.c.l.b16 %v139
    %v172 = vunpack.c.l.b16 %v140
    %v173 = vunpack.c.l.b16 %v141
    %v174 = vunpack.c.l.b16 %v142
    %v175 = vunpack.c.l.b16 %v143
    %v176 = vunpack.c.l.b16 %v144
    %v177 = vunpack.c.l.b16 %v145
    %v178 = vpack.c.b16 %v171, %v170
    %v179 = vpack.c.b16 %v173, %v172
    %v180 = vpack.c.b16 %v175, %v174
    %v181 = vpack.c.b16 %v177, %v176
    %v202 = vunpack.c.l.b16 %v146
    %v203 = vunpack.c.l.b16 %v147
    %v204 = vunpack.c.l.b16 %v148
    %v205 = vunpack.c.l.b16 %v149
    %v206 = vunpack.c.l.b16 %v150
    %v207 = vunpack.c.l.b16 %v151
    %v208 = vunpack.c.l.b16 %v152
    %v209 = vunpack.c.l.b16 %v153
    %v210 = vunpack.c.l.b16 %v154
    %v211 = vunpack.c.l.b16 %v155
    %v212 = vunpack.c.l.b16 %v156
    %v213 = vunpack.c.l.b16 %v157
    %v214 = vunpack.c.l.b16 %v158
    %v215 = vunpack.c.l.b16 %v159
    %v216 = vunpack.c.l.b16 %v160
    %v217 = vunpack.c.l.b16 %v161
    %v218 = vpack.c.b16 %v203, %v202
    %v219 = vpack.c.b16 %v205, %v204
    %v220 = vpack.c.b16 %v207, %v206
    %v221 = vpack.c.b16 %v209, %v208
    %v222 = vpack.c.b16 %v211, %v210
    %v223 = vpack.c.b16 %v213, %v212
    %v224 = vpack.c.b16 %v215, %v214
    %v225 = vpack.c.b16 %v217, %v216
    %234 = vmatprep.subr.bf16.mxu0 0
    %235 = vmatpush1.bf16.msra.mxu0 %v218
    %236 = vmatprep.subr.bf16.mxu0 0
    %237 = vmatpush1.bf16.msra.mxu0 %v219
    %238 = vmatprep.subr.bf16.mxu0 0
    %239 = vmatpush1.bf16.msra.mxu0 %v220
    %240 = vmatprep.subr.bf16.mxu0 0
    %241 = vmatpush1.bf16.msra.mxu0 %v221
    %242 = vmatprep.subr.bf16.mxu0 0
    %243 = vmatpush1.bf16.msra.mxu0 %v222
    %244 = vmatprep.subr.bf16.mxu0 0
    %245 = vmatpush1.bf16.msra.mxu0 %v223
    %246 = vmatprep.subr.bf16.mxu0 0
    %247 = vmatpush1.bf16.msra.mxu0 %v224
    %248 = vmatprep.subr.bf16.mxu0 0
    %249 = vmatpush1.bf16.msra.mxu0 %v225
    %250 = vmatprep.subr.bf16.mxu0 0
    %251 = vmatpush1.bf16.msra.mxu0 0
    %252 = vmatprep.subr.bf16.mxu0 0
    %253 = vmatpush1.bf16.msra.mxu0 0
    %254 = vmatprep.subr.bf16.mxu0 0
    %255 = vmatpush1.bf16.msra.mxu0 0
    %256 = vmatprep.subr.bf16.mxu0 0
    %257 = vmatpush1.bf16.msra.mxu0 0
    %258 = vmatprep.subr.bf16.mxu0 0
    %259 = vmatpush1.bf16.msra.mxu0 0
    %260 = vmatprep.subr.bf16.mxu0 0
    %261 = vmatpush1.bf16.msra.mxu0 0
    %262 = vmatprep.subr.bf16.mxu0 0
    %263 = vmatpush1.bf16.msra.mxu0 0
    %264 = vmatprep.subr.bf16.mxu0 0
    %265 = vmatpush1.bf16.msra.mxu0 0
    %266 = vmatprep.mubr.bf16.mxu0 0
    %267 = vmatmul.mubr.bf16.gmra.mrb[0].mxu0 %v178
    %v268 = vpop.f32.mrb[0].mxu0
    %v269 = vadd.f32 0.0, %v268
    %v270 = vpop.f32.mrb[0].mxu0
    %v271 = vpop.f32.mrb[0].mxu0
    %v272 = vadd.f32 0.0, %v271
    %v273 = vpop.f32.mrb[0].mxu0
    %274 = vmatprep.mubr.bf16.mxu0 0
    %275 = vmatmul.mubr.bf16.gmra.mrb[0].mxu0 %v179
    %v276 = vpop.f32.mrb[0].mxu0
    %v277 = vadd.f32 0.0, %v276
    %v278 = vpop.f32.mrb[0].mxu0
    %v279 = vpop.f32.mrb[0].mxu0
    %v280 = vadd.f32 0.0, %v279
    %v281 = vpop.f32.mrb[0].mxu0
    %282 = vmatprep.mubr.bf16.mxu0 0
    %283 = vmatmul.mubr.bf16.gmra.mrb[0].mxu0 %v180
    %v284 = vpop.f32.mrb[0].mxu0
    %v285 = vadd.f32 0.0, %v284
    %v286 = vpop.f32.mrb[0].mxu0
    %v287 = vpop.f32.mrb[0].mxu0
    %v288 = vadd.f32 0.0, %v287
    %v289 = vpop.f32.mrb[0].mxu0
    %290 = vmatprep.mubr.bf16.mxu0 0
    %291 = vmatmul.mubr.bf16.gmra.mrb[0].mxu0 %v181
    %v292 = vpop.f32.mrb[0].mxu0
    %v293 = vadd.f32 0.0, %v292
    %v294 = vpop.f32.mrb[0].mxu0
    %v295 = vpop.f32.mrb[0].mxu0
    %v296 = vadd.f32 0.0, %v295
    %v297 = vpop.f32.mrb[0].mxu0
    %298 = vdwg.mxu0
    %v299 = vld [vmem:[%s0] sm:$0xf]
    %v300 = vld [vmem:[%s0 + $0x4] sm:$0xf]
    %v301 = vld [vmem:[%s0 + $0x8] sm:$0xf]
    %v302 = vld [vmem:[%s0 + $0xc] sm:$0xf]
    %v303 = vld [vmem:[%s0 + $0x10] sm:$0xf]
    %v304 = vld [vmem:[%s0 + $0x14] sm:$0xf]
    %v305 = vld [vmem:[%s0 + $0x18] sm:$0xf]
    %v306 = vld [vmem:[%s0 + $0x1c] sm:$0xf]
    %v307 = vpack.c.bf16 %v272, %v269
    %v308 = vpack.c.bf16 %v280, %v277
    %v309 = vpack.c.bf16 %v288, %v285
    %v310 = vpack.c.bf16 %v296, %v293
    %v311 = vld [vmem:[#allocation6] sm:$0x1]
    %v313 = vlaneseq
    %v314 = vshrl.u32 %v313, 7
    %v315 = vsub.s32 0, %v314
    %v316 = vrot.slane %v311, %v315
    %v326 = vunpack.c.l.b16 %v299
    %v327 = vunpack.c.l.b16 %v300
    %v328 = vunpack.c.l.b16 %v301
    %v329 = vunpack.c.l.b16 %v302
    %v330 = vunpack.c.l.b16 %v303
    %v331 = vunpack.c.l.b16 %v304
    %v332 = vunpack.c.l.b16 %v305
    %v333 = vunpack.c.l.b16 %v306
    %v334 = vpack.c.b16 %v327, %v326
    %v335 = vpack.c.b16 %v329, %v328
    %v336 = vpack.c.b16 %v331, %v330
    %v337 = vpack.c.b16 %v333, %v332
    %vm338 = vcmask 523264
    %v340 = vsel %vm338, %v334, 0
    %v343 = vsel %vm338, %v335, 0
    %v346 = vsel %vm338, %v336, 0
    %v349 = vsel %vm338, %v337, 0
    %351 = vmatprep.subr.bf16.mxu0 0
    %352 = vmatpush1.bf16.msra.mxu0 %v307
    %353 = vmatprep.subr.bf16.mxu0 0
    %354 = vmatpush1.bf16.msra.mxu0 %v308
    %355 = vmatprep.subr.bf16.mxu0 0
    %356 = vmatpush1.bf16.msra.mxu0 %v309
    %357 = vmatprep.subr.bf16.mxu0 0
    %358 = vmatpush1.bf16.msra.mxu0 %v310
    %359 = vmatprep.subr.bf16.mxu0 0
    %360 = vmatpush1.bf16.msra.mxu0 0
    %361 = vmatprep.subr.bf16.mxu0 0
    %362 = vmatpush1.bf16.msra.mxu0 0
    %363 = vmatprep.subr.bf16.mxu0 0
    %364 = vmatpush1.bf16.msra.mxu0 0
    %365 = vmatprep.subr.bf16.mxu0 0
    %366 = vmatpush1.bf16.msra.mxu0 0
    %367 = vmatprep.subr.bf16.mxu0 0
    %368 = vmatpush1.bf16.msra.mxu0 0
    %369 = vmatprep.subr.bf16.mxu0 0
    %370 = vmatpush1.bf16.msra.mxu0 0
    %371 = vmatprep.subr.bf16.mxu0 0
    %372 = vmatpush1.bf16.msra.mxu0 0
    %373 = vmatprep.subr.bf16.mxu0 0
    %374 = vmatpush1.bf16.msra.mxu0 0
    %375 = vmatprep.subr.bf16.mxu0 0
    %376 = vmatpush1.bf16.msra.mxu0 0
    %377 = vmatprep.subr.bf16.mxu0 0
    %378 = vmatpush1.bf16.msra.mxu0 0
    %379 = vmatprep.subr.bf16.mxu0 0
    %380 = vmatpush1.bf16.msra.mxu0 0
    %381 = vmatprep.subr.bf16.mxu0 0
    %382 = vmatpush1.bf16.msra.mxu0 0
    %383 = vmatprep.mubr.bf16.mxu0 0
    %384 = vmatmul.mubr.bf16.gmra.mrb[0].mxu0 %v340
    %v385 = vpop.f32.mrb[0].mxu0
    %v386 = vadd.f32 %v316, %v385
    %v387 = vpop.f32.mrb[0].mxu0
    %v388 = vpop.f32.mrb[0].mxu0
    %v389 = vadd.f32 %v316, %v388
    %v390 = vpop.f32.mrb[0].mxu0
    %391 = vmatprep.mubr.bf16.mxu0 0
    %392 = vmatmul.mubr.bf16.gmra.mrb[0].mxu0 %v343
    %v393 = vpop.f32.mrb[0].mxu0
    %v394 = vadd.f32 %v316, %v393
    %v395 = vpop.f32.mrb[0].mxu0
    %v396 = vpop.f32.mrb[0].mxu0
    %v397 = vadd.f32 %v316, %v396
    %v398 = vpop.f32.mrb[0].mxu0
    %399 = vmatprep.mubr.bf16.mxu0 0
    %400 = vmatmul.mubr.bf16.gmra.mrb[0].mxu0 %v346
    %v401 = vpop.f32.mrb[0].mxu0
    %v402 = vadd.f32 %v316, %v401
    %v403 = vpop.f32.mrb[0].mxu0
    %v404 = vpop.f32.mrb[0].mxu0
    %v405 = vadd.f32 %v316, %v404
    %v406 = vpop.f32.mrb[0].mxu0
    %407 = vmatprep.mubr.bf16.mxu0 0
    %408 = vmatmul.mubr.bf16.gmra.mrb[0].mxu0 %v349
    %v409 = vpop.f32.mrb[0].mxu0
    %v410 = vadd.f32 %v316, %v409
    %v411 = vpop.f32.mrb[0].mxu0
    %v412 = vpop.f32.mrb[0].mxu0
    %v413 = vadd.f32 %v316, %v412
    %v414 = vpop.f32.mrb[0].mxu0
    %415 = vdwg.mxu0
    %v416 = vmax.f32 %v386, 0.0
    %v417 = vmax.f32 %v389, 0.0
    %v418 = vmax.f32 %v394, 0.0
    %v419 = vmax.f32 %v397, 0.0
    %v420 = vmax.f32 %v402, 0.0
    %v421 = vmax.f32 %v405, 0.0
    %v422 = vmax.f32 %v410, 0.0
    %v423 = vmax.f32 %v413, 0.0
    %v424 = vpack.c.bf16 %v417, %v416
    %v425 = vpack.c.bf16 %v419, %v418
    %v426 = vpack.c.bf16 %v421, %v420
    %v427 = vpack.c.bf16 %v423, %v422
    %428 = vmatprep.subr.bf16.mxu0 0
    %429 = vmatpush1.bf16.msra.mxu0 %v424
    %430 = vmatprep.subr.bf16.mxu0 0
    %431 = vmatpush1.bf16.msra.mxu0 %v425
    %432 = vmatprep.subr.bf16.mxu0 0
    %433 = vmatpush1.bf16.msra.mxu0 %v426
    %434 = vmatprep.subr.bf16.mxu0 0
    %435 = vmatpush1.bf16.msra.mxu0 %v427
    %436 = vmatprep.subr.bf16.mxu0 0
    %437 = vmatpush1.bf16.msra.mxu0 0
    %438 = vmatprep.subr.bf16.mxu0 0
    %439 = vmatpush1.bf16.msra.mxu0 0
    %440 = vmatprep.subr.bf16.mxu0 0
    %441 = vmatpush1.bf16.msra.mxu0 0
    %442 = vmatprep.subr.bf16.mxu0 0
    %443 = vmatpush1.bf16.msra.mxu0 0
    %444 = vmatprep.subr.bf16.mxu0 0
    %445 = vmatpush1.bf16.msra.mxu0 0
    %446 = vmatprep.subr.bf16.mxu0 0
    %447 = vmatpush1.bf16.msra.mxu0 0
    %448 = vmatprep.subr.bf16.mxu0 0
    %449 = vmatpush1.bf16.msra.mxu0 0
    %450 = vmatprep.subr.bf16.mxu0 0
    %451 = vmatpush1.bf16.msra.mxu0 0
    %452 = vmatprep.subr.bf16.mxu0 0
    %453 = vmatpush1.bf16.msra.mxu0 0
    %454 = vmatprep.subr.bf16.mxu0 0
    %455 = vmatpush1.bf16.msra.mxu0 0
    %456 = vmatprep.subr.bf16.mxu0 0
    %457 = vmatpush1.bf16.msra.mxu0 0
    %458 = vmatprep.subr.bf16.mxu0 0
    %459 = vmatpush1.bf16.msra.mxu0 0
    %460 = vmatprep.mubr.bf16.mxu0 0
    %461 = vmatmul.mubr.bf16.gmra.mrb[0].mxu0 %v340
    %v462 = vpop.f32.mrb[0].mxu0
    %v463 = vadd.f32 0.0, %v462
    %v464 = vpop.f32.mrb[0].mxu0
    %v465 = vpop.f32.mrb[0].mxu0
    %v466 = vadd.f32 0.0, %v465
    %v467 = vpop.f32.mrb[0].mxu0
    %468 = vmatprep.mubr.bf16.mxu0 0
    %469 = vmatmul.mubr.bf16.gmra.mrb[0].mxu0 %v343
    %v470 = vpop.f32.mrb[0].mxu0
    %v471 = vadd.f32 0.0, %v470
    %v472 = vpop.f32.mrb[0].mxu0
    %v473 = vpop.f32.mrb[0].mxu0
    %v474 = vadd.f32 0.0, %v473
    %v475 = vpop.f32.mrb[0].mxu0
    %476 = vmatprep.mubr.bf16.mxu0 0
    %477 = vmatmul.mubr.bf16.gmra.mrb[0].mxu0 %v346
    %v478 = vpop.f32.mrb[0].mxu0
    %v479 = vadd.f32 0.0, %v478
    %v480 = vpop.f32.mrb[0].mxu0
    %v481 = vpop.f32.mrb[0].mxu0
    %v482 = vadd.f32 0.0, %v481
    %v483 = vpop.f32.mrb[0].mxu0
    %484 = vmatprep.mubr.bf16.mxu0 0
    %485 = vmatmul.mubr.bf16.gmra.mrb[0].mxu0 %v349
    %v486 = vpop.f32.mrb[0].mxu0
    %v487 = vadd.f32 0.0, %v486
    %v488 = vpop.f32.mrb[0].mxu0
    %v489 = vpop.f32.mrb[0].mxu0
    %v490 = vadd.f32 0.0, %v489
    %v491 = vpop.f32.mrb[0].mxu0
    %492 = vdwg.mxu0
    %v493 = vpack.c.bf16 %v466, %v463
    %v494 = vpack.c.bf16 %v474, %v471
    %v495 = vpack.c.bf16 %v482, %v479
    %v496 = vpack.c.bf16 %v490, %v487
    %v497 = vld [vmem:[#allocation7] sm:$0xf]
    %v498 = vld [vmem:[#allocation7 + $0x4] sm:$0xf]
    %v499 = vld [vmem:[#allocation7 + $0x8] sm:$0xf]
    %v500 = vld [vmem:[#allocation7 + $0xc] sm:$0xf]
    %v501 = vld [vmem:[#allocation7 + $0x10] sm:$0xf]
    %v502 = vld [vmem:[#allocation7 + $0x14] sm:$0xf]
    %v503 = vld [vmem:[#allocation7 + $0x18] sm:$0xf]
    %v504 = vld [vmem:[#allocation7 + $0x1c] sm:$0xf]
    %v505 = vld [vmem:[#allocation7 + $0x20] sm:$0xf]
    %v506 = vld [vmem:[#allocation7 + $0x24] sm:$0xf]
    %v507 = vld [vmem:[#allocation7 + $0x28] sm:$0xf]
    %v508 = vld [vmem:[#allocation7 + $0x2c] sm:$0xf]
    %v509 = vld [vmem:[#allocation7 + $0x30] sm:$0xf]
    %v510 = vld [vmem:[#allocation7 + $0x34] sm:$0xf]
    %v511 = vld [vmem:[#allocation7 + $0x38] sm:$0xf]
    %v512 = vld [vmem:[#allocation7 + $0x3c] sm:$0xf]
    %v513 = vld [vmem:[%s5] sm:$0x1]
    %v515 = vlaneseq
    %v516 = vshrl.u32 %v515, 7
    %v517 = vsub.s32 0, %v516
    %v518 = vrot.slane %v513, %v517
    %v536 = vunpack.c.l.b16 %v497
    %v537 = vunpack.c.l.b16 %v498
    %v538 = vunpack.c.l.b16 %v499
    %v539 = vunpack.c.l.b16 %v500
    %v540 = vunpack.c.l.b16 %v501
    %v541 = vunpack.c.l.b16 %v502
    %v542 = vunpack.c.l.b16 %v503
    %v543 = vunpack.c.l.b16 %v504
    %v544 = vunpack.c.l.b16 %v505
    %v545 = vunpack.c.l.b16 %v506
    %v546 = vunpack.c.l.b16 %v507
    %v547 = vunpack.c.l.b16 %v508
    %v548 = vunpack.c.l.b16 %v509
    %v549 = vunpack.c.l.b16 %v510
    %v550 = vunpack.c.l.b16 %v511
    %v551 = vunpack.c.l.b16 %v512
    %v552 = vpack.c.b16 %v537, %v536
    %v553 = vpack.c.b16 %v539, %v538
    %v554 = vpack.c.b16 %v541, %v540
    %v555 = vpack.c.b16 %v543, %v542
    %v556 = vpack.c.b16 %v545, %v544
    %v557 = vpack.c.b16 %v547, %v546
    %v558 = vpack.c.b16 %v549, %v548
    %v559 = vpack.c.b16 %v551, %v550
    %568 = vmatprep.subr.bf16.mxu0 0
    %569 = vmatpush1.bf16.msra.mxu0 %v552
    %570 = vmatprep.subr.bf16.mxu0 0
    %571 = vmatpush1.bf16.msra.mxu0 %v553
    %572 = vmatprep.subr.bf16.mxu0 0
    %573 = vmatpush1.bf16.msra.mxu0 %v554
    %574 = vmatprep.subr.bf16.mxu0 0
    %575 = vmatpush1.bf16.msra.mxu0 %v555
    %576 = vmatprep.subr.bf16.mxu0 0
    %577 = vmatpush1.bf16.msra.mxu0 %v556
    %578 = vmatprep.subr.bf16.mxu0 0
    %579 = vmatpush1.bf16.msra.mxu0 %v557
    %580 = vmatprep.subr.bf16.mxu0 0
    %581 = vmatpush1.bf16.msra.mxu0 %v558
    %582 = vmatprep.subr.bf16.mxu0 0
    %583 = vmatpush1.bf16.msra.mxu0 %v559
    %584 = vmatprep.subr.bf16.mxu0 0
    %585 = vmatpush1.bf16.msra.mxu0 0
    %586 = vmatprep.subr.bf16.mxu0 0
    %587 = vmatpush1.bf16.msra.mxu0 0
    %588 = vmatprep.subr.bf16.mxu0 0
    %589 = vmatpush1.bf16.msra.mxu0 0
    %590 = vmatprep.subr.bf16.mxu0 0
    %591 = vmatpush1.bf16.msra.mxu0 0
    %592 = vmatprep.subr.bf16.mxu0 0
    %593 = vmatpush1.bf16.msra.mxu0 0
    %594 = vmatprep.subr.bf16.mxu0 0
    %595 = vmatpush1.bf16.msra.mxu0 0
    %596 = vmatprep.subr.bf16.mxu0 0
    %597 = vmatpush1.bf16.msra.mxu0 0
    %598 = vmatprep.subr.bf16.mxu0 0
    %599 = vmatpush1.bf16.msra.mxu0 0
    %600 = vmatprep.mubr.bf16.mxu0 0
    %601 = vmatmul.mubr.bf16.gmra.mrb[0].mxu0 %v493
    %v602 = vpop.f32.mrb[0].mxu0
    %v603 = vadd.f32 %v518, %v602
    %v604 = vpop.f32.mrb[0].mxu0
    %v605 = vpop.f32.mrb[0].mxu0
    %v606 = vadd.f32 %v518, %v605
    %v607 = vpop.f32.mrb[0].mxu0
    %608 = vmatprep.mubr.bf16.mxu0 0
    %609 = vmatmul.mubr.bf16.gmra.mrb[0].mxu0 %v494
    %v610 = vpop.f32.mrb[0].mxu0
    %v611 = vadd.f32 %v518, %v610
    %v612 = vpop.f32.mrb[0].mxu0
    %v613 = vpop.f32.mrb[0].mxu0
    %v614 = vadd.f32 %v518, %v613
    %v615 = vpop.f32.mrb[0].mxu0
    %616 = vmatprep.mubr.bf16.mxu0 0
    %617 = vmatmul.mubr.bf16.gmra.mrb[0].mxu0 %v495
    %v618 = vpop.f32.mrb[0].mxu0
    %v619 = vadd.f32 %v518, %v618
    %v620 = vpop.f32.mrb[0].mxu0
    %v621 = vpop.f32.mrb[0].mxu0
    %v622 = vadd.f32 %v518, %v621
    %v623 = vpop.f32.mrb[0].mxu0
    %624 = vmatprep.mubr.bf16.mxu0 0
    %625 = vmatmul.mubr.bf16.gmra.mrb[0].mxu0 %v496
    %v626 = vpop.f32.mrb[0].mxu0
    %v627 = vadd.f32 %v518, %v626
    %v628 = vpop.f32.mrb[0].mxu0
    %v629 = vpop.f32.mrb[0].mxu0
    %v630 = vadd.f32 %v518, %v629
    %v631 = vpop.f32.mrb[0].mxu0
    %632 = vdwg.mxu0
    %v633 = vpack.c.bf16 %v606, %v603
    %v634 = vpack.c.bf16 %v614, %v611
    %v635 = vpack.c.bf16 %v622, %v619
    %v636 = vpack.c.bf16 %v630, %v627
    %v637 = vlaneseq
    %v638 = vand.u32 %v637, 127
    %v639 = vld [vmem:[%s6] sm:$0xff]
    %v640 = vld [vmem:[%s6 + $0x8] sm:$0xff]
    %641 = vset.pattern.permute.xlu0 0
    %642 = vperm.xlu0 %641, %v639
    %v643 = vpop.permute.xlu0 %642
    %644 = vset.pattern.permute.xlu0 0
    %645 = vperm.xlu0 %644, %v640
    %v646 = vpop.permute.xlu0 %645
    %vm647 = vcmp.eq.s32.totalorder %v643, %v638
    %vm648 = vcmp.eq.s32.totalorder %v646, %v638
    %v649 = vsel %vm647, 1, 0
    %v650 = vsel %vm648, 1, 0
    %v651 = vcvt.s32.f32 %v649
    %v652 = vcvt.s32.f32 %v650
    %v653 = vpack.c.bf16 %v652, %v651
    %v654 = vld [vmem:[%s7] sm:$0xff]
    %v655 = vld [vmem:[%s7 + $0x8] sm:$0xff]
    %656 = vset.pattern.permute.xlu0 0
    %657 = vperm.xlu0 %656, %v654
    %v658 = vpop.permute.xlu0 %657
    %659 = vset.pattern.permute.xlu0 0
    %660 = vperm.xlu0 %659, %v655
    %v661 = vpop.permute.xlu0 %660
    %vm662 = vcmp.eq.s32.totalorder %v658, %v638
    %vm663 = vcmp.eq.s32.totalorder %v661, %v638
    %v664 = vsel %vm662, 1, 0
    %v665 = vsel %vm663, 1, 0
    %v666 = vcvt.s32.f32 %v664
    %v667 = vcvt.s32.f32 %v665
    %v668 = vpack.c.bf16 %v667, %v666
    %v670 = vsel %vm338, %v653, 0
    %672 = vmatprep.subr.bf16.mxu0 0
    %673 = vmatpush1.bf16.msra.mxu0 %v633
    %674 = vmatprep.subr.bf16.mxu0 0
    %675 = vmatpush1.bf16.msra.mxu0 %v634
    %676 = vmatprep.subr.bf16.mxu0 0
    %677 = vmatpush1.bf16.msra.mxu0 %v635
    %678 = vmatprep.subr.bf16.mxu0 0
    %679 = vmatpush1.bf16.msra.mxu0 %v636
    %680 = vmatprep.subr.bf16.mxu0 0
    %681 = vmatpush1.bf16.msra.mxu0 0
    %682 = vmatprep.subr.bf16.mxu0 0
    %683 = vmatpush1.bf16.msra.mxu0 0
    %684 = vmatprep.subr.bf16.mxu0 0
    %685 = vmatpush1.bf16.msra.mxu0 0
    %686 = vmatprep.subr.bf16.mxu0 0
    %687 = vmatpush1.bf16.msra.mxu0 0
    %688 = vmatprep.subr.bf16.mxu0 0
    %689 = vmatpush1.bf16.msra.mxu0 0
    %690 = vmatprep.subr.bf16.mxu0 0
    %691 = vmatpush1.bf16.msra.mxu0 0
    %692 = vmatprep.subr.bf16.mxu0 0
    %693 = vmatpush1.bf16.msra.mxu0 0
    %694 = vmatprep.subr.bf16.mxu0 0
    %695 = vmatpush1.bf16.msra.mxu0 0
    %696 = vmatprep.subr.bf16.mxu0 0
    %697 = vmatpush1.bf16.msra.mxu0 0
    %698 = vmatprep.subr.bf16.mxu0 0
    %699 = vmatpush1.bf16.msra.mxu0 0
    %700 = vmatprep.subr.bf16.mxu0 0
    %701 = vmatpush1.bf16.msra.mxu0 0
    %702 = vmatprep.subr.bf16.mxu0 0
    %703 = vmatpush1.bf16.msra.mxu0 0
    %704 = vmatprep.mubr.bf16.mxu0 0
    %705 = vmatmul.mubr.bf16.gmra.mrb[0].mxu0 %v670
    %v706 = vpop.f32.mrb[0].mxu0
    %v707 = vadd.f32 0.0, %v706
    %v708 = vpop.f32.mrb[0].mxu0
    %v709 = vpop.f32.mrb[0].mxu0
    %v710 = vadd.f32 0.0, %v709
    %v711 = vpop.f32.mrb[0].mxu0
    %712 = vdwg.mxu0
    %v713 = vpack.c.bf16 %v710, %v707
    %v715 = vsel %vm338, %v668, 0
    %717 = vmatprep.subr.bf16.mxu0 0
    %718 = vmatpush1.bf16.msra.mxu0 %v633
    %719 = vmatprep.subr.bf16.mxu0 0
    %720 = vmatpush1.bf16.msra.mxu0 %v634
    %721 = vmatprep.subr.bf16.mxu0 0
    %722 = vmatpush1.bf16.msra.mxu0 %v635
    %723 = vmatprep.subr.bf16.mxu0 0
    %724 = vmatpush1.bf16.msra.mxu0 %v636
    %725 = vmatprep.subr.bf16.mxu0 0
    %726 = vmatpush1.bf16.msra.mxu0 0
    %727 = vmatprep.subr.bf16.mxu0 0
    %728 = vmatpush1.bf16.msra.mxu0 0
    %729 = vmatprep.subr.bf16.mxu0 0
    %730 = vmatpush1.bf16.msra.mxu0 0
    %731 = vmatprep.subr.bf16.mxu0 0
    %732 = vmatpush1.bf16.msra.mxu0 0
    %733 = vmatprep.subr.bf16.mxu0 0
    %734 = vmatpush1.bf16.msra.mxu0 0
    %735 = vmatprep.subr.bf16.mxu0 0
    %736 = vmatpush1.bf16.msra.mxu0 0
    %737 = vmatprep.subr.bf16.mxu0 0
    %738 = vmatpush1.bf16.msra.mxu0 0
    %739 = vmatprep.subr.bf16.mxu0 0
    %740 = vmatpush1.bf16.msra.mxu0 0
    %741 = vmatprep.subr.bf16.mxu0 0
    %742 = vmatpush1.bf16.msra.mxu0 0
    %743 = vmatprep.subr.bf16.mxu0 0
    %744 = vmatpush1.bf16.msra.mxu0 0
    %745 = vmatprep.subr.bf16.mxu0 0
    %746 = vmatpush1.bf16.msra.mxu0 0
    %747 = vmatprep.subr.bf16.mxu0 0
    %748 = vmatpush1.bf16.msra.mxu0 0
    %749 = vmatprep.mubr.bf16.mxu0 0
    %750 = vmatmul.mubr.bf16.gmra.mrb[0].mxu0 %v715
    %v751 = vpop.f32.mrb[0].mxu0
    %v752 = vadd.f32 0.0, %v751
    %v753 = vpop.f32.mrb[0].mxu0
    %v754 = vpop.f32.mrb[0].mxu0
    %v755 = vadd.f32 0.0, %v754
    %v756 = vpop.f32.mrb[0].mxu0
    %757 = vdwg.mxu0
    %v758 = vpack.c.bf16 %v755, %v752
    %v759 = vld [vmem:[#allocation9] sm:$0xff]
    %v760 = vld [vmem:[#allocation9 + $0x8] sm:$0xff]
    %v761 = vld [vmem:[#allocation9 + $0x10] sm:$0xff]
    %v762 = vld [vmem:[#allocation9 + $0x18] sm:$0xff]
    %v763 = vld [vmem:[#allocation9 + $0x20] sm:$0xff]
    %v764 = vld [vmem:[#allocation9 + $0x28] sm:$0xff]
    %v765 = vld [vmem:[#allocation9 + $0x30] sm:$0xff]
    %v766 = vld [vmem:[#allocation9 + $0x38] sm:$0xff]
    %v767 = vld [vmem:[#allocation9 + $0x40] sm:$0xff]
    %v768 = vld [vmem:[#allocation9 + $0x48] sm:$0xff]
    %v769 = vld [vmem:[#allocation9 + $0x50] sm:$0xff]
    %v770 = vld [vmem:[#allocation9 + $0x58] sm:$0xff]
    %v771 = vld [vmem:[#allocation9 + $0x60] sm:$0xff]
    %v772 = vld [vmem:[#allocation9 + $0x68] sm:$0xff]
    %v773 = vld [vmem:[#allocation9 + $0x70] sm:$0xff]
    %v774 = vld [vmem:[#allocation9 + $0x78] sm:$0xff]
    %v775 = vld [vmem:[#allocation9 + $0x80] sm:$0xff]
    %v776 = vld [vmem:[#allocation9 + $0x88] sm:$0xff]
    %v777 = vld [vmem:[#allocation9 + $0x90] sm:$0xff]
    %v778 = vld [vmem:[#allocation9 + $0x98] sm:$0xff]
    %v779 = vld [vmem:[#allocation9 + $0xa0] sm:$0xff]
    %v780 = vld [vmem:[#allocation9 + $0xa8] sm:$0xff]
    %v781 = vld [vmem:[#allocation9 + $0xb0] sm:$0xff]
    %v782 = vld [vmem:[#allocation9 + $0xb8] sm:$0xff]
    %v783 = vld [vmem:[#allocation9 + $0xc0] sm:$0xff]
    %v784 = vld [vmem:[#allocation9 + $0xc8] sm:$0xff]
    %v785 = vld [vmem:[#allocation9 + $0xd0] sm:$0xff]
    %v786 = vld [vmem:[#allocation9 + $0xd8] sm:$0xff]
    %v787 = vld [vmem:[#allocation9 + $0xe0] sm:$0xff]
    %v788 = vld [vmem:[#allocation9 + $0xe8] sm:$0xff]
    %v789 = vld [vmem:[#allocation9 + $0xf0] sm:$0xff]
    %v790 = vld [vmem:[#allocation9 + $0xf8] sm:$0xff]
    %v791 = vld [vmem:[%s8] sm:$0xf]
    %v792 = vld [vmem:[%s8 + $0x4] sm:$0xf]
    %v793 = vld [vmem:[#allocation10] sm:$0xff]
    %v794 = vld [vmem:[#allocation10 + $0x8] sm:$0xff]
    %v795 = vld [vmem:[#allocation10 + $0x10] sm:$0xff]
    %v796 = vld [vmem:[#allocation10 + $0x18] sm:$0xff]
    %v797 = vld [vmem:[#allocation10 + $0x20] sm:$0xff]
    %v798 = vld [vmem:[#allocation10 + $0x28] sm:$0xff]
    %v799 = vld [vmem:[#allocation10 + $0x30] sm:$0xff]
    %v800 = vld [vmem:[#allocation10 + $0x38] sm:$0xff]
    %v801 = vld [vmem:[#allocation10 + $0x40] sm:$0xff]
    %v802 = vld [vmem:[#allocation10 + $0x48] sm:$0xff]
    %v803 = vld [vmem:[#allocation10 + $0x50] sm:$0xff]
    %v804 = vld [vmem:[#allocation10 + $0x58] sm:$0xff]
    %v805 = vld [vmem:[#allocation10 + $0x60] sm:$0xff]
    %v806 = vld [vmem:[#allocation10 + $0x68] sm:$0xff]
    %v807 = vld [vmem:[#allocation10 + $0x70] sm:$0xff]
    %v808 = vld [vmem:[#allocation10 + $0x78] sm:$0xff]
    %v809 = vld [vmem:[#allocation10 + $0x80] sm:$0xff]
    %v810 = vld [vmem:[#allocation10 + $0x88] sm:$0xff]
    %v811 = vld [vmem:[#allocation10 + $0x90] sm:$0xff]
    %v812 = vld [vmem:[#allocation10 + $0x98] sm:$0xff]
    %v813 = vld [vmem:[#allocation10 + $0xa0] sm:$0xff]
    %v814 = vld [vmem:[#allocation10 + $0xa8] sm:$0xff]
    %v815 = vld [vmem:[#allocation10 + $0xb0] sm:$0xff]
    %v816 = vld [vmem:[#allocation10 + $0xb8] sm:$0xff]
    %v817 = vld [vmem:[#allocation10 + $0xc0] sm:$0xff]
    %v818 = vld [vmem:[#allocation10 + $0xc8] sm:$0xff]
    %v819 = vld [vmem:[#allocation10 + $0xd0] sm:$0xff]
    %v820 = vld [vmem:[#allocation10 + $0xd8] sm:$0xff]
    %v821 = vld [vmem:[#allocation10 + $0xe0] sm:$0xff]
    %v822 = vld [vmem:[#allocation10 + $0xe8] sm:$0xff]
    %v823 = vld [vmem:[#allocation10 + $0xf0] sm:$0xff]
    %v824 = vld [vmem:[#allocation10 + $0xf8] sm:$0xff]
    %v827 = vunpack.c.l.b16 %v791
    %v828 = vunpack.c.l.b16 %v792
    %v829 = vpack.c.b16 %v828, %v827
    %v863 = vunpack.c.l.b16 %v793
    %v864 = vunpack.c.h.b16 %v793
    %v865 = vunpack.c.l.b16 %v794
    %v866 = vunpack.c.h.b16 %v794
    %v867 = vunpack.c.l.b16 %v795
    %v868 = vunpack.c.h.b16 %v795
    %v869 = vunpack.c.l.b16 %v796
    %v870 = vunpack.c.h.b16 %v796
    %v871 = vunpack.c.l.b16 %v797
    %v872 = vunpack.c.h.b16 %v797
    %v873 = vunpack.c.l.b16 %v798
    %v874 = vunpack.c.h.b16 %v798
    %v875 = vunpack.c.l.b16 %v799
    %v876 = vunpack.c.h.b16 %v799
    %v877 = vunpack.c.l.b16 %v800
    %v878 = vunpack.c.h.b16 %v800
    %v879 = vunpack.c.l.b16 %v801
    %v880 = vunpack.c.h.b16 %v801
    %v881 = vunpack.c.l.b16 %v802
    %v882 = vunpack.c.h.b16 %v802
    %v883 = vunpack.c.l.b16 %v803
    %v884 = vunpack.c.h.b16 %v803
    %v885 = vunpack.c.l.b16 %v804
    %v886 = vunpack.c.h.b16 %v804
    %v887 = vunpack.c.l.b16 %v805
    %v888 = vunpack.c.h.b16 %v805
    %v889 = vunpack.c.l.b16 %v806
    %v890 = vunpack.c.h.b16 %v806
    %v891 = vunpack.c.l.b16 %v807
    %v892 = vunpack.c.h.b16 %v807
    %v893 = vunpack.c.l.b16 %v808
    %v894 = vunpack.c.h.b16 %v808
    %v895 = vunpack.c.l.b16 %v809
    %v896 = vunpack.c.h.b16 %v809
    %v897 = vunpack.c.l.b16 %v810
    %v898 = vunpack.c.h.b16 %v810
    %v899 = vunpack.c.l.b16 %v811
    %v900 = vunpack.c.h.b16 %v811
    %v901 = vunpack.c.l.b16 %v812
    %v902 = vunpack.c.h.b16 %v812
    %v903 = vunpack.c.l.b16 %v813
    %v904 = vunpack.c.h.b16 %v813
    %v905 = vunpack.c.l.b16 %v814
    %v906 = vunpack.c.h.b16 %v814
    %v907 = vunpack.c.l.b16 %v815
    %v908 = vunpack.c.h.b16 %v815
    %v909 = vunpack.c.l.b16 %v816
    %v910 = vunpack.c.h.b16 %v816
    %v911 = vunpack.c.l.b16 %v817
    %v912 = vunpack.c.h.b16 %v817
    %v913 = vunpack.c.l.b16 %v818
    %v914 = vunpack.c.h.b16 %v818
    %v915 = vunpack.c.l.b16 %v819
    %v916 = vunpack.c.h.b16 %v819
    %v917 = vunpack.c.l.b16 %v820
    %v918 = vunpack.c.h.b16 %v820
    %v919 = vunpack.c.l.b16 %v821
    %v920 = vunpack.c.h.b16 %v821
    %v921 = vunpack.c.l.b16 %v822
    %v922 = vunpack.c.h.b16 %v822
    %v923 = vunpack.c.l.b16 %v823
    %v924 = vunpack.c.h.b16 %v823
    %v925 = vunpack.c.l.b16 %v824
    %v926 = vunpack.c.h.b16 %v824
    %v927 = vpack.c.b16 %v867, %v863
    %v928 = vpack.c.b16 %v868, %v864
    %v929 = vpack.c.b16 %v869, %v865
    %v930 = vpack.c.b16 %v870, %v866
    %v931 = vpack.c.b16 %v875, %v871
    %v932 = vpack.c.b16 %v876, %v872
    %v933 = vpack.c.b16 %v877, %v873
    %v934 = vpack.c.b16 %v878, %v874
    %v935 = vpack.c.b16 %v883, %v879
    %v936 = vpack.c.b16 %v884, %v880
    %v937 = vpack.c.b16 %v885, %v881
    %v938 = vpack.c.b16 %v886, %v882
    %v939 = vpack.c.b16 %v891, %v887
    %v940 = vpack.c.b16 %v892, %v888
    %v941 = vpack.c.b16 %v893, %v889
    %v942 = vpack.c.b16 %v894, %v890
    %v943 = vpack.c.b16 %v899, %v895
    %v944 = vpack.c.b16 %v900, %v896
    %v945 = vpack.c.b16 %v901, %v897
    %v946 = vpack.c.b16 %v902, %v898
    %v947 = vpack.c.b16 %v907, %v903
    %v948 = vpack.c.b16 %v908, %v904
    %v949 = vpack.c.b16 %v909, %v905
    %v950 = vpack.c.b16 %v910, %v906
    %v951 = vpack.c.b16 %v915, %v911
    %v952 = vpack.c.b16 %v916, %v912
    %v953 = vpack.c.b16 %v917, %v913
    %v954 = vpack.c.b16 %v918, %v914
    %v955 = vpack.c.b16 %v923, %v919
    %v956 = vpack.c.b16 %v924, %v920
    %v957 = vpack.c.b16 %v925, %v921
    %v958 = vpack.c.b16 %v926, %v922
    %991 = vmatprep.subr.bf16.mxu0 %v928
    %992 = vmatpush1.bf16.msra.mxu0 %v927
    %993 = vmatprep.subr.bf16.mxu0 %v932
    %994 = vmatpush1.bf16.msra.mxu0 %v931
    %995 = vmatprep.subr.bf16.mxu0 %v936
    %996 = vmatpush1.bf16.msra.mxu0 %v935
    %997 = vmatprep.subr.bf16.mxu0 %v940
    %998 = vmatpush1.bf16.msra.mxu0 %v939
    %999 = vmatprep.subr.bf16.mxu0 %v944
    %1000 = vmatpush1.bf16.msra.mxu0 %v943
    %1001 = vmatprep.subr.bf16.mxu0 %v948
    %1002 = vmatpush1.bf16.msra.mxu0 %v947
    %1003 = vmatprep.subr.bf16.mxu0 %v952
    %1004 = vmatpush1.bf16.msra.mxu0 %v951
    %1005 = vmatprep.subr.bf16.mxu0 %v956
    %1006 = vmatpush1.bf16.msra.mxu0 %v955
    %1007 = vmatprep.subr.bf16.mxu0 0
    %1008 = vmatpush1.bf16.msra.mxu0 0
    %1009 = vmatprep.subr.bf16.mxu0 0
    %1010 = vmatpush1.bf16.msra.mxu0 0
    %1011 = vmatprep.subr.bf16.mxu0 0
    %1012 = vmatpush1.bf16.msra.mxu0 0
    %1013 = vmatprep.subr.bf16.mxu0 0
    %1014 = vmatpush1.bf16.msra.mxu0 0
    %1015 = vmatprep.subr.bf16.mxu0 0
    %1016 = vmatpush1.bf16.msra.mxu0 0
    %1017 = vmatprep.subr.bf16.mxu0 0
    %1018 = vmatpush1.bf16.msra.mxu0 0
    %1019 = vmatprep.subr.bf16.mxu0 0
    %1020 = vmatpush1.bf16.msra.mxu0 0
    %1021 = vmatprep.subr.bf16.mxu0 0
    %1022 = vmatpush1.bf16.msra.mxu0 0
    %1023 = vmatprep.mubr.bf16.mxu0 0
    %1024 = vmatmul.mubr.bf16.gmra.mrb[0].mxu0 %v829
    %v1025 = vpop.f32.mrb[0].mxu0
    %v1026 = vadd.f32 0.0, %v1025
    %v1027 = vpop.f32.mrb[0].mxu0
    %v1028 = vpop.f32.mrb[0].mxu0
    %v1029 = vadd.f32 0.0, %v1028
    %v1030 = vpop.f32.mrb[0].mxu0
    %1031 = vdwg.mxu0
    %1032 = vmatprep.subr.bf16.mxu0 %v930
    %1033 = vmatpush1.bf16.msra.mxu0 %v929
    %1034 = vmatprep.subr.bf16.mxu0 %v934
    %1035 = vmatpush1.bf16.msra.mxu0 %v933
    %1036 = vmatprep.subr.bf16.mxu0 %v938
    %1037 = vmatpush1.bf16.msra.mxu0 %v937
    %1038 = vmatprep.subr.bf16.mxu0 %v942
    %1039 = vmatpush1.bf16.msra.mxu0 %v941
    %1040 = vmatprep.subr.bf16.mxu0 %v946
    %1041 = vmatpush1.bf16.msra.mxu0 %v945
    %1042 = vmatprep.subr.bf16.mxu0 %v950
    %1043 = vmatpush1.bf16.msra.mxu0 %v949
    %1044 = vmatprep.subr.bf16.mxu0 %v954
    %1045 = vmatpush1.bf16.msra.mxu0 %v953
    %1046 = vmatprep.subr.bf16.mxu0 %v958
    %1047 = vmatpush1.bf16.msra.mxu0 %v957
    %1048 = vmatprep.subr.bf16.mxu0 0
    %1049 = vmatpush1.bf16.msra.mxu0 0
    %1050 = vmatprep.subr.bf16.mxu0 0
    %1051 = vmatpush1.bf16.msra.mxu0 0
    %1052 = vmatprep.subr.bf16.mxu0 0
    %1053 = vmatpush1.bf16.msra.mxu0 0
    %1054 = vmatprep.subr.bf16.mxu0 0
    %1055 = vmatpush1.bf16.msra.mxu0 0
    %1056 = vmatprep.subr.bf16.mxu0 0
    %1057 = vmatpush1.bf16.msra.mxu0 0
    %1058 = vmatprep.subr.bf16.mxu0 0
    %1059 = vmatpush1.bf16.msra.mxu0 0
    %1060 = vmatprep.subr.bf16.mxu0 0
    %1061 = vmatpush1.bf16.msra.mxu0 0
    %1062 = vmatprep.subr.bf16.mxu0 0
    %1063 = vmatpush1.bf16.msra.mxu0 0
    %1064 = vmatprep.mubr.bf16.mxu0 0
    %1065 = vmatmul.mubr.bf16.gmra.mrb[0].mxu0 %v829
    %v1066 = vpop.f32.mrb[0].mxu0
    %v1067 = vadd.f32 0.0, %v1066
    %v1068 = vpop.f32.mrb[0].mxu0
    %v1069 = vadd.f32 0.0, %v1068
    %v1070 = vpop.f32.mrb[0].mxu0
    %v1071 = vadd.f32 0.0, %v1070
    %v1072 = vpop.f32.mrb[0].mxu0
    %v1073 = vadd.f32 0.0, %v1072
    %1074 = vdwg.mxu0
    %v1107 = vunpack.c.l.b16 %v759
    %v1108 = vunpack.c.h.b16 %v759
    %v1109 = vunpack.c.l.b16 %v760
    %v1110 = vunpack.c.h.b16 %v760
    %v1111 = vunpack.c.l.b16 %v761
    %v1112 = vunpack.c.h.b16 %v761
    %v1113 = vunpack.c.l.b16 %v762
    %v1114 = vunpack.c.h.b16 %v762
    %v1115 = vunpack.c.l.b16 %v763
    %v1116 = vunpack.c.h.b16 %v763
    %v1117 = vunpack.c.l.b16 %v764
    %v1118 = vunpack.c.h.b16 %v764
    %v1119 = vunpack.c.l.b16 %v765
    %v1120 = vunpack.c.h.b16 %v765
    %v1121 = vunpack.c.l.b16 %v766
    %v1122 = vunpack.c.h.b16 %v766
    %v1123 = vunpack.c.l.b16 %v767
    %v1124 = vunpack.c.h.b16 %v767
    %v1125 = vunpack.c.l.b16 %v768
    %v1126 = vunpack.c.h.b16 %v768
    %v1127 = vunpack.c.l.b16 %v769
    %v1128 = vunpack.c.h.b16 %v769
    %v1129 = vunpack.c.l.b16 %v770
    %v1130 = vunpack.c.h.b16 %v770
    %v1131 = vunpack.c.l.b16 %v771
    %v1132 = vunpack.c.h.b16 %v771
    %v1133 = vunpack.c.l.b16 %v772
    %v1134 = vunpack.c.h.b16 %v772
    %v1135 = vunpack.c.l.b16 %v773
    %v1136 = vunpack.c.h.b16 %v773
    %v1137 = vunpack.c.l.b16 %v774
    %v1138 = vunpack.c.h.b16 %v774
    %v1139 = vunpack.c.l.b16 %v775
    %v1140 = vunpack.c.h.b16 %v775
    %v1141 = vunpack.c.l.b16 %v776
    %v1142 = vunpack.c.h.b16 %v776
    %v1143 = vunpack.c.l.b16 %v777
    %v1144 = vunpack.c.h.b16 %v777
    %v1145 = vunpack.c.l.b16 %v778
    %v1146 = vunpack.c.h.b16 %v778
    %v1147 = vunpack.c.l.b16 %v779
    %v1148 = vunpack.c.h.b16 %v779
    %v1149 = vunpack.c.l.b16 %v780
    %v1150 = vunpack.c.h.b16 %v780
    %v1151 = vunpack.c.l.b16 %v781
    %v1152 = vunpack.c.h.b16 %v781
    %v1153 = vunpack.c.l.b16 %v782
    %v1154 = vunpack.c.h.b16 %v782
    %v1155 = vunpack.c.l.b16 %v783
    %v1156 = vunpack.c.h.b16 %v783
    %v1157 = vunpack.c.l.b16 %v784
    %v1158 = vunpack.c.h.b16 %v784
    %v1159 = vunpack.c.l.b16 %v785
    %v1160 = vunpack.c.h.b16 %v785
    %v1161 = vunpack.c.l.b16 %v786
    %v1162 = vunpack.c.h.b16 %v786
    %v1163 = vunpack.c.l.b16 %v787
    %v1164 = vunpack.c.h.b16 %v787
    %v1165 = vunpack.c.l.b16 %v788
    %v1166 = vunpack.c.h.b16 %v788
    %v1167 = vunpack.c.l.b16 %v789
    %v1168 = vunpack.c.h.b16 %v789
    %v1169 = vunpack.c.l.b16 %v790
    %v1170 = vunpack.c.h.b16 %v790
    %v1171 = vpack.c.b16 %v1111, %v1107
    %v1172 = vpack.c.b16 %v1112, %v1108
    %v1173 = vpack.c.b16 %v1113, %v1109
    %v1174 = vpack.c.b16 %v1114, %v1110
    %v1175 = vpack.c.b16 %v1119, %v1115
    %v1176 = vpack.c.b16 %v1120, %v1116
    %v1177 = vpack.c.b16 %v1121, %v1117
    %v1178 = vpack.c.b16 %v1122, %v1118
    %v1179 = vpack.c.b16 %v1127, %v1123
    %v1180 = vpack.c.b16 %v1128, %v1124
    %v1181 = vpack.c.b16 %v1129, %v1125
    %v1182 = vpack.c.b16 %v1130, %v1126
    %v1183 = vpack.c.b16 %v1135, %v1131
    %v1184 = vpack.c.b16 %v1136, %v1132
    %v1185 = vpack.c.b16 %v1137, %v1133
    %v1186 = vpack.c.b16 %v1138, %v1134
    %v1187 = vpack.c.b16 %v1143, %v1139
    %v1188 = vpack.c.b16 %v1144, %v1140
    %v1189 = vpack.c.b16 %v1145, %v1141
    %v1190 = vpack.c.b16 %v1146, %v1142
    %v1191 = vpack.c.b16 %v1151, %v1147
    %v1192 = vpack.c.b16 %v1152, %v1148
    %v1193 = vpack.c.b16 %v1153, %v1149
    %v1194 = vpack.c.b16 %v1154, %v1150
    %v1195 = vpack.c.b16 %v1159, %v1155
    %v1196 = vpack.c.b16 %v1160, %v1156
    %v1197 = vpack.c.b16 %v1161, %v1157
    %v1198 = vpack.c.b16 %v1162, %v1158
    %v1199 = vpack.c.b16 %v1167, %v1163
    %v1200 = vpack.c.b16 %v1168, %v1164
    %v1201 = vpack.c.b16 %v1169, %v1165
    %v1202 = vpack.c.b16 %v1170, %v1166
    %1235 = vmatprep.subr.bf16.mxu0 %v1172
    %1236 = vmatpush1.bf16.msra.mxu0 %v1171
    %1237 = vmatprep.subr.bf16.mxu0 %v1176
    %1238 = vmatpush1.bf16.msra.mxu0 %v1175
    %1239 = vmatprep.subr.bf16.mxu0 %v1180
    %1240 = vmatpush1.bf16.msra.mxu0 %v1179
    %1241 = vmatprep.subr.bf16.mxu0 %v1184
    %1242 = vmatpush1.bf16.msra.mxu0 %v1183
    %1243 = vmatprep.subr.bf16.mxu0 %v1188
    %1244 = vmatpush1.bf16.msra.mxu0 %v1187
    %1245 = vmatprep.subr.bf16.mxu0 %v1192
    %1246 = vmatpush1.bf16.msra.mxu0 %v1191
    %1247 = vmatprep.subr.bf16.mxu0 %v1196
    %1248 = vmatpush1.bf16.msra.mxu0 %v1195
    %1249 = vmatprep.subr.bf16.mxu0 %v1200
    %1250 = vmatpush1.bf16.msra.mxu0 %v1199
    %1251 = vmatprep.subr.bf16.mxu0 0
    %1252 = vmatpush1.bf16.msra.mxu0 0
    %1253 = vmatprep.subr.bf16.mxu0 0
    %1254 = vmatpush1.bf16.msra.mxu0 0
    %1255 = vmatprep.subr.bf16.mxu0 0
    %1256 = vmatpush1.bf16.msra.mxu0 0
    %1257 = vmatprep.subr.bf16.mxu0 0
    %1258 = vmatpush1.bf16.msra.mxu0 0
    %1259 = vmatprep.subr.bf16.mxu0 0
    %1260 = vmatpush1.bf16.msra.mxu0 0
    %1261 = vmatprep.subr.bf16.mxu0 0
    %1262 = vmatpush1.bf16.msra.mxu0 0
    %1263 = vmatprep.subr.bf16.mxu0 0
    %1264 = vmatpush1.bf16.msra.mxu0 0
    %1265 = vmatprep.subr.bf16.mxu0 0
    %1266 = vmatpush1.bf16.msra.mxu0 0
    %1267 = vmatprep.mubr.bf16.mxu0 0
    %1268 = vmatmul.mubr.bf16.gmra.mrb[0].mxu0 %v713
    %v1269 = vpop.f32.mrb[0].mxu0
    %v1270 = vadd.f32 %v1026, %v1269
    %v1271 = vpop.f32.mrb[0].mxu0
    %v1272 = vpop.f32.mrb[0].mxu0
    %v1273 = vadd.f32 %v1029, %v1272
    %v1274 = vpop.f32.mrb[0].mxu0
    %1275 = vdwg.mxu0
    %1276 = vmatprep.subr.bf16.mxu0 %v1174
    %1277 = vmatpush1.bf16.msra.mxu0 %v1173
    %1278 = vmatprep.subr.bf16.mxu0 %v1178
    %1279 = vmatpush1.bf16.msra.mxu0 %v1177
    %1280 = vmatprep.subr.bf16.mxu0 %v1182
    %1281 = vmatpush1.bf16.msra.mxu0 %v1181
    %1282 = vmatprep.subr.bf16.mxu0 %v1186
    %1283 = vmatpush1.bf16.msra.mxu0 %v1185
    %1284 = vmatprep.subr.bf16.mxu0 %v1190
    %1285 = vmatpush1.bf16.msra.mxu0 %v1189
    %1286 = vmatprep.subr.bf16.mxu0 %v1194
    %1287 = vmatpush1.bf16.msra.mxu0 %v1193
    %1288 = vmatprep.subr.bf16.mxu0 %v1198
    %1289 = vmatpush1.bf16.msra.mxu0 %v1197
    %1290 = vmatprep.subr.bf16.mxu0 %v1202
    %1291 = vmatpush1.bf16.msra.mxu0 %v1201
    %1292 = vmatprep.subr.bf16.mxu0 0
    %1293 = vmatpush1.bf16.msra.mxu0 0
    %1294 = vmatprep.subr.bf16.mxu0 0
    %1295 = vmatpush1.bf16.msra.mxu0 0
    %1296 = vmatprep.subr.bf16.mxu0 0
    %1297 = vmatpush1.bf16.msra.mxu0 0
    %1298 = vmatprep.subr.bf16.mxu0 0
    %1299 = vmatpush1.bf16.msra.mxu0 0
    %1300 = vmatprep.subr.bf16.mxu0 0
    %1301 = vmatpush1.bf16.msra.mxu0 0
    %1302 = vmatprep.subr.bf16.mxu0 0
    %1303 = vmatpush1.bf16.msra.mxu0 0
    %1304 = vmatprep.subr.bf16.mxu0 0
    %1305 = vmatpush1.bf16.msra.mxu0 0
    %1306 = vmatprep.subr.bf16.mxu0 0
    %1307 = vmatpush1.bf16.msra.mxu0 0
    %1308 = vmatprep.mubr.bf16.mxu0 0
    %1309 = vmatmul.mubr.bf16.gmra.mrb[0].mxu0 %v713
    %v1310 = vpop.f32.mrb[0].mxu0
    %v1311 = vadd.f32 %v1067, %v1310
    %v1312 = vpop.f32.mrb[0].mxu0
    %v1313 = vadd.f32 %v1069, %v1312
    %v1314 = vpop.f32.mrb[0].mxu0
    %v1315 = vadd.f32 %v1071, %v1314
    %v1316 = vpop.f32.mrb[0].mxu0
    %v1317 = vadd.f32 %v1073, %v1316
    %1318 = vdwg.mxu0
    %v1319 = vld [vmem:[#allocation12] sm:$0xff]
    %v1320 = vld [vmem:[#allocation12 + $0x8] sm:$0xff]
    %v1321 = vld [vmem:[#allocation12 + $0x10] sm:$0xff]
    %v1322 = vld [vmem:[#allocation12 + $0x18] sm:$0xff]
    %v1323 = vld [vmem:[#allocation12 + $0x20] sm:$0xff]
    %v1324 = vld [vmem:[#allocation12 + $0x28] sm:$0xff]
    %v1325 = vld [vmem:[#allocation12 + $0x30] sm:$0xff]
    %v1326 = vld [vmem:[#allocation12 + $0x38] sm:$0xff]
    %v1327 = vld [vmem:[#allocation12 + $0x40] sm:$0xff]
    %v1328 = vld [vmem:[#allocation12 + $0x48] sm:$0xff]
    %v1329 = vld [vmem:[#allocation12 + $0x50] sm:$0xff]
    %v1330 = vld [vmem:[#allocation12 + $0x58] sm:$0xff]
    %v1331 = vld [vmem:[#allocation12 + $0x60] sm:$0xff]
    %v1332 = vld [vmem:[#allocation12 + $0x68] sm:$0xff]
    %v1333 = vld [vmem:[#allocation12 + $0x70] sm:$0xff]
    %v1334 = vld [vmem:[#allocation12 + $0x78] sm:$0xff]
    %v1335 = vld [vmem:[#allocation12 + $0x80] sm:$0xff]
    %v1336 = vld [vmem:[#allocation12 + $0x88] sm:$0xff]
    %v1337 = vld [vmem:[#allocation12 + $0x90] sm:$0xff]
    %v1338 = vld [vmem:[#allocation12 + $0x98] sm:$0xff]
    %v1339 = vld [vmem:[#allocation12 + $0xa0] sm:$0xff]
    %v1340 = vld [vmem:[#allocation12 + $0xa8] sm:$0xff]
    %v1341 = vld [vmem:[#allocation12 + $0xb0] sm:$0xff]
    %v1342 = vld [vmem:[#allocation12 + $0xb8] sm:$0xff]
    %v1343 = vld [vmem:[#allocation12 + $0xc0] sm:$0xff]
    %v1344 = vld [vmem:[#allocation12 + $0xc8] sm:$0xff]
    %v1345 = vld [vmem:[#allocation12 + $0xd0] sm:$0xff]
    %v1346 = vld [vmem:[#allocation12 + $0xd8] sm:$0xff]
    %v1347 = vld [vmem:[#allocation12 + $0xe0] sm:$0xff]
    %v1348 = vld [vmem:[#allocation12 + $0xe8] sm:$0xff]
    %v1349 = vld [vmem:[#allocation12 + $0xf0] sm:$0xff]
    %v1350 = vld [vmem:[#allocation12 + $0xf8] sm:$0xff]
    %v1383 = vunpack.c.l.b16 %v1319
    %v1384 = vunpack.c.h.b16 %v1319
    %v1385 = vunpack.c.l.b16 %v1320
    %v1386 = vunpack.c.h.b16 %v1320
    %v1387 = vunpack.c.l.b16 %v1321
    %v1388 = vunpack.c.h.b16 %v1321
    %v1389 = vunpack.c.l.b16 %v1322
    %v1390 = vunpack.c.h.b16 %v1322
    %v1391 = vunpack.c.l.b16 %v1323
    %v1392 = vunpack.c.h.b16 %v1323
    %v1393 = vunpack.c.l.b16 %v1324
    %v1394 = vunpack.c.h.b16 %v1324
    %v1395 = vunpack.c.l.b16 %v1325
    %v1396 = vunpack.c.h.b16 %v1325
    %v1397 = vunpack.c.l.b16 %v1326
    %v1398 = vunpack.c.h.b16 %v1326
    %v1399 = vunpack.c.l.b16 %v1327
    %v1400 = vunpack.c.h.b16 %v1327
    %v1401 = vunpack.c.l.b16 %v1328
    %v1402 = vunpack.c.h.b16 %v1328
    %v1403 = vunpack.c.l.b16 %v1329
    %v1404 = vunpack.c.h.b16 %v1329
    %v1405 = vunpack.c.l.b16 %v1330
    %v1406 = vunpack.c.h.b16 %v1330
    %v1407 = vunpack.c.l.b16 %v1331
    %v1408 = vunpack.c.h.b16 %v1331
    %v1409 = vunpack.c.l.b16 %v1332
    %v1410 = vunpack.c.h.b16 %v1332
    %v1411 = vunpack.c.l.b16 %v1333
    %v1412 = vunpack.c.h.b16 %v1333
    %v1413 = vunpack.c.l.b16 %v1334
    %v1414 = vunpack.c.h.b16 %v1334
    %v1415 = vunpack.c.l.b16 %v1335
    %v1416 = vunpack.c.h.b16 %v1335
    %v1417 = vunpack.c.l.b16 %v1336
    %v1418 = vunpack.c.h.b16 %v1336
    %v1419 = vunpack.c.l.b16 %v1337
    %v1420 = vunpack.c.h.b16 %v1337
    %v1421 = vunpack.c.l.b16 %v1338
    %v1422 = vunpack.c.h.b16 %v1338
    %v1423 = vunpack.c.l.b16 %v1339
    %v1424 = vunpack.c.h.b16 %v1339
    %v1425 = vunpack.c.l.b16 %v1340
    %v1426 = vunpack.c.h.b16 %v1340
    %v1427 = vunpack.c.l.b16 %v1341
    %v1428 = vunpack.c.h.b16 %v1341
    %v1429 = vunpack.c.l.b16 %v1342
    %v1430 = vunpack.c.h.b16 %v1342
    %v1431 = vunpack.c.l.b16 %v1343
    %v1432 = vunpack.c.h.b16 %v1343
    %v1433 = vunpack.c.l.b16 %v1344
    %v1434 = vunpack.c.h.b16 %v1344
    %v1435 = vunpack.c.l.b16 %v1345
    %v1436 = vunpack.c.h.b16 %v1345
    %v1437 = vunpack.c.l.b16 %v1346
    %v1438 = vunpack.c.h.b16 %v1346
    %v1439 = vunpack.c.l.b16 %v1347
    %v1440 = vunpack.c.h.b16 %v1347
    %v1441 = vunpack.c.l.b16 %v1348
    %v1442 = vunpack.c.h.b16 %v1348
    %v1443 = vunpack.c.l.b16 %v1349
    %v1444 = vunpack.c.h.b16 %v1349
    %v1445 = vunpack.c.l.b16 %v1350
    %v1446 = vunpack.c.h.b16 %v1350
    %v1447 = vpack.c.b16 %v1387, %v1383
    %v1448 = vpack.c.b16 %v1388, %v1384
    %v1449 = vpack.c.b16 %v1389, %v1385
    %v1450 = vpack.c.b16 %v1390, %v1386
    %v1451 = vpack.c.b16 %v1395, %v1391
    %v1452 = vpack.c.b16 %v1396, %v1392
    %v1453 = vpack.c.b16 %v1397, %v1393
    %v1454 = vpack.c.b16 %v1398, %v1394
    %v1455 = vpack.c.b16 %v1403, %v1399
    %v1456 = vpack.c.b16 %v1404, %v1400
    %v1457 = vpack.c.b16 %v1405, %v1401
    %v1458 = vpack.c.b16 %v1406, %v1402
    %v1459 = vpack.c.b16 %v1411, %v1407
    %v1460 = vpack.c.b16 %v1412, %v1408
    %v1461 = vpack.c.b16 %v1413, %v1409
    %v1462 = vpack.c.b16 %v1414, %v1410
    %v1463 = vpack.c.b16 %v1419, %v1415
    %v1464 = vpack.c.b16 %v1420, %v1416
    %v1465 = vpack.c.b16 %v1421, %v1417
    %v1466 = vpack.c.b16 %v1422, %v1418
    %v1467 = vpack.c.b16 %v1427, %v1423
    %v1468 = vpack.c.b16 %v1428, %v1424
    %v1469 = vpack.c.b16 %v1429, %v1425
    %v1470 = vpack.c.b16 %v1430, %v1426
    %v1471 = vpack.c.b16 %v1435, %v1431
    %v1472 = vpack.c.b16 %v1436, %v1432
    %v1473 = vpack.c.b16 %v1437, %v1433
    %v1474 = vpack.c.b16 %v1438, %v1434
    %v1475 = vpack.c.b16 %v1443, %v1439
    %v1476 = vpack.c.b16 %v1444, %v1440
    %v1477 = vpack.c.b16 %v1445, %v1441
    %v1478 = vpack.c.b16 %v1446, %v1442
    %1511 = vmatprep.subr.bf16.mxu0 %v1448
    %1512 = vmatpush1.bf16.msra.mxu0 %v1447
    %1513 = vmatprep.subr.bf16.mxu0 %v1452
    %1514 = vmatpush1.bf16.msra.mxu0 %v1451
    %1515 = vmatprep.subr.bf16.mxu0 %v1456
    %1516 = vmatpush1.bf16.msra.mxu0 %v1455
    %1517 = vmatprep.subr.bf16.mxu0 %v1460
    %1518 = vmatpush1.bf16.msra.mxu0 %v1459
    %1519 = vmatprep.subr.bf16.mxu0 %v1464
    %1520 = vmatpush1.bf16.msra.mxu0 %v1463
    %1521 = vmatprep.subr.bf16.mxu0 %v1468
    %1522 = vmatpush1.bf16.msra.mxu0 %v1467
    %1523 = vmatprep.subr.bf16.mxu0 %v1472
    %1524 = vmatpush1.bf16.msra.mxu0 %v1471
    %1525 = vmatprep.subr.bf16.mxu0 %v1476
    %1526 = vmatpush1.bf16.msra.mxu0 %v1475
    %1527 = vmatprep.subr.bf16.mxu0 0
    %1528 = vmatpush1.bf16.msra.mxu0 0
    %1529 = vmatprep.subr.bf16.mxu0 0
    %1530 = vmatpush1.bf16.msra.mxu0 0
    %1531 = vmatprep.subr.bf16.mxu0 0
    %1532 = vmatpush1.bf16.msra.mxu0 0
    %1533 = vmatprep.subr.bf16.mxu0 0
    %1534 = vmatpush1.bf16.msra.mxu0 0
    %1535 = vmatprep.subr.bf16.mxu0 0
    %1536 = vmatpush1.bf16.msra.mxu0 0
    %1537 = vmatprep.subr.bf16.mxu0 0
    %1538 = vmatpush1.bf16.msra.mxu0 0
    %1539 = vmatprep.subr.bf16.mxu0 0
    %1540 = vmatpush1.bf16.msra.mxu0 0
    %1541 = vmatprep.subr.bf16.mxu0 0
    %1542 = vmatpush1.bf16.msra.mxu0 0
    %1543 = vmatprep.mubr.bf16.mxu0 0
    %1544 = vmatmul.mubr.bf16.gmra.mrb[0].mxu0 %v758
    %v1545 = vpop.f32.mrb[0].mxu0
    %v1546 = vadd.f32 0.0, %v1545
    %v1547 = vpop.f32.mrb[0].mxu0
    %v1548 = vpop.f32.mrb[0].mxu0
    %v1549 = vadd.f32 0.0, %v1548
    %v1550 = vpop.f32.mrb[0].mxu0
    %1551 = vdwg.mxu0
    %1552 = vmatprep.subr.bf16.mxu0 %v1450
    %1553 = vmatpush1.bf16.msra.mxu0 %v1449
    %1554 = vmatprep.subr.bf16.mxu0 %v1454
    %1555 = vmatpush1.bf16.msra.mxu0 %v1453
    %1556 = vmatprep.subr.bf16.mxu0 %v1458
    %1557 = vmatpush1.bf16.msra.mxu0 %v1457
    %1558 = vmatprep.subr.bf16.mxu0 %v1462
    %1559 = vmatpush1.bf16.msra.mxu0 %v1461
    %1560 = vmatprep.subr.bf16.mxu0 %v1466
    %1561 = vmatpush1.bf16.msra.mxu0 %v1465
    %1562 = vmatprep.subr.bf16.mxu0 %v1470
    %1563 = vmatpush1.bf16.msra.mxu0 %v1469
    %1564 = vmatprep.subr.bf16.mxu0 %v1474
    %1565 = vmatpush1.bf16.msra.mxu0 %v1473
    %1566 = vmatprep.subr.bf16.mxu0 %v1478
    %1567 = vmatpush1.bf16.msra.mxu0 %v1477
    %1568 = vmatprep.subr.bf16.mxu0 0
    %1569 = vmatpush1.bf16.msra.mxu0 0
    %1570 = vmatprep.subr.bf16.mxu0 0
    %1571 = vmatpush1.bf16.msra.mxu0 0
    %1572 = vmatprep.subr.bf16.mxu0 0
    %1573 = vmatpush1.bf16.msra.mxu0 0
    %1574 = vmatprep.subr.bf16.mxu0 0
    %1575 = vmatpush1.bf16.msra.mxu0 0
    %1576 = vmatprep.subr.bf16.mxu0 0
    %1577 = vmatpush1.bf16.msra.mxu0 0
    %1578 = vmatprep.subr.bf16.mxu0 0
    %1579 = vmatpush1.bf16.msra.mxu0 0
    %1580 = vmatprep.subr.bf16.mxu0 0
    %1581 = vmatpush1.bf16.msra.mxu0 0
    %1582 = vmatprep.subr.bf16.mxu0 0
    %1583 = vmatpush1.bf16.msra.mxu0 0
    %1584 = vmatprep.mubr.bf16.mxu0 0
    %1585 = vmatmul.mubr.bf16.gmra.mrb[0].mxu0 %v758
    %v1586 = vpop.f32.mrb[0].mxu0
    %v1587 = vadd.f32 0.0, %v1586
    %v1588 = vpop.f32.mrb[0].mxu0
    %v1589 = vadd.f32 0.0, %v1588
    %v1590 = vpop.f32.mrb[0].mxu0
    %v1591 = vadd.f32 0.0, %v1590
    %v1592 = vpop.f32.mrb[0].mxu0
    %v1593 = vadd.f32 0.0, %v1592
    %1594 = vdwg.mxu0
    %v1595 = vadd.f32 %v1270, %v1546
    %v1596 = vadd.f32 %v1311, %v1587
    %v1597 = vadd.f32 %v1313, %v1589
    %v1598 = vadd.f32 %v1273, %v1549
    %v1599 = vadd.f32 %v1315, %v1591
    %v1600 = vadd.f32 %v1317, %v1593
    %v1601 = vld [vmem:[%s12] sm:$0xf]
    %v1603 = vlaneseq
    %v1604 = vshrl.u32 %v1603, 7
    %v1605 = vsub.s32 0, %v1604
    %v1606 = vrot.slane %v1601, %v1605
    %v1607 = vlaneseq
    %v1608 = vshrl.u32 %v1607, 7
    %v1609 = vsub.s32 2, %v1608
    %v1610 = vrot.slane %v1601, %v1609
    %v1611 = vlaneseq
    %v1612 = vshrl.u32 %v1611, 7
    %v1613 = vsub.s32 3, %v1612
    %v1614 = vrot.slane %v1601, %v1613
    %v1618 = vadd.f32 %v1595, %v1606
    %v1619 = vadd.f32 %v1596, %v1610
    %v1620 = vadd.f32 %v1597, %v1614
    %v1621 = vadd.f32 %v1598, %v1606
    %v1622 = vadd.f32 %v1599, %v1610
    %v1623 = vadd.f32 %v1600, %v1614
    %v1624 = vxor.u32 %v1618, 2147483648
    %v1625 = vxor.u32 %v1621, 2147483648
    %v1626 = vmul.f32 %v1624, 1.442695
    %v1627 = vpow.pop %v1626
    %v1628 = vmul.f32 %v1625, 1.442695
    %v1629 = vpow.pop %v1628
    %v1630 = vadd.f32 %v1627, 1.0
    %v1631 = vadd.f32 %v1629, 1.0
    %v1632 = vrcp.pop %v1630
    %v1633 = vmul.f32 1.0, %v1632
    %v1634 = vrcp.pop %v1631
    %v1635 = vmul.f32 1.0, %v1634
    %v1636 = vtanh.pop %v1619
    %v1637 = vtanh.pop %v1622
    %v1638 = vxor.u32 %v1620, 2147483648
    %v1639 = vxor.u32 %v1623, 2147483648
    %v1640 = vmul.f32 %v1638, 1.442695
    %v1641 = vpow.pop %v1640
    %v1642 = vmul.f32 %v1639, 1.442695
    %v1643 = vpow.pop %v1642
    %v1644 = vadd.f32 %v1641, 1.0
    %v1645 = vadd.f32 %v1643, 1.0
    %v1646 = vrcp.pop %v1644
    %v1647 = vmul.f32 1.0, %v1646
    %v1648 = vrcp.pop %v1645
    %v1649 = vmul.f32 1.0, %v1648
    %v1650 = vmul.f32 %v1633, %v1636
    %v1651 = vmul.f32 %v1635, %v1637
    %v1652 = vtanh.pop %v1650
    %v1653 = vtanh.pop %v1651
    %v1654 = vmul.f32 %v1647, %v1652
    %v1655 = vmul.f32 %v1649, %v1653
    %1656 = vadd.xlane.f32.xlu0 %v1654
    %v1657 = vpop.xlane.xlu0 %1656
    %1658 = vadd.xlane.f32.xlu0 %v1655
    %v1659 = vpop.xlane.xlu0 %1658
    %v1660 = vxor.u32 %v1657, 2147483648
    %v1661 = vxor.u32 %v1659, 2147483648
    %v1662 = vmul.f32 %v1660, 1.442695
    %v1663 = vpow.pop %v1662
    %v1664 = vmul.f32 %v1661, 1.442695
    %v1665 = vpow.pop %v1664
    %v1666 = vadd.f32 %v1663, 1.0
    %v1667 = vadd.f32 %v1665, 1.0
    %v1668 = vrcp.pop %v1666
    %v1669 = vmul.f32 1.0, %v1668
    %v1670 = vrcp.pop %v1667
    %v1671 = vmul.f32 1.0, %v1670
    %1672 = vst [vmem:[%s13] sm:$0xff] %v1669
    %1673 = vst [vmem:[%s13 + $0x8] sm:$0xff] %v1671
    // Predicated region
    $region82: #{saar_forward.1} parent=1 // pred_check
      _
    $region83: #{saar_forward.1} parent=1 // pred_check_branch
      %1675 = sbr.rel (0) target = $region85
    $region84: #{saar_forward.1} parent=1 // pred_region
      _
    $region85: #{saar_forward.1} parent=1 // pred_fallthru
      _
    // Predicated region
    $region86: #{saar_forward.1} parent=1 // pred_check
      _
    $region87: #{saar_forward.1} parent=1 // pred_check_branch
      %1677 = sbr.rel (0) target = $region89
    $region88: #{saar_forward.1} parent=1 // pred_region
      _
    $region89: #{saar_forward.1} parent=1 // pred_fallthru
      _
    %1678 = vsyncpa [#allocation3], 1
    %1679 = vsyncpa [#allocation5], 1
    %1680 = vsyncpa [#allocation8], 1
    %1681 = vsyncpa [#allocation11], 1

</llo_original>
